<compile_context>
chip_gen: v7x
topology: tpu7x:2x2x1
jax: 0.10.0
libtpu: 0.0.40
codegen_flags: <defaults>
</compile_context>

<pallas_src>
import functools

import jax
import jax.numpy as jnp
from jax import lax
from jax.experimental import pallas as pl
from jax.experimental.pallas import tpu as pltpu

HIDDEN = 32
SUBLANE = 8
DEFAULT_TILE_B = 8192                 # rows of x per grid step (clamped to batch size)
CHUNK_B = 512                         # rows per in-kernel compute chunk
VMEM_LIMIT_BYTES = 48 * 1024 * 1024   # safe on v7x (64 MiB VMEM), well under v5e/v6e physical


def _mlp_kernel(x_ref, w1_ref, b1_ref, w2_ref, b2_ref, w3_ref, b3_ref, o_ref, *, chunk_b):
    w1 = w1_ref[...]; b1 = b1_ref[...]
    w2 = w2_ref[...]; b2 = b2_ref[...]
    w3 = w3_ref[...]; b3 = b3_ref[...]

    def compute_rows(x):
        h1 = jnp.maximum(
            jnp.dot(x, w1, preferred_element_type=jnp.float32,
                    precision=lax.Precision.HIGHEST) + b1, 0.0)
        h2 = jnp.maximum(
            jnp.dot(h1, w2, preferred_element_type=jnp.float32,
                    precision=lax.Precision.HIGHEST) + b2, 0.0)
        return jnp.dot(h2, w3, preferred_element_type=jnp.float32,
                       precision=lax.Precision.HIGHEST) + b3

    tile_rows = x_ref.shape[0]
    n_chunks = tile_rows // chunk_b

    if n_chunks <= 1:
        # Small tile: straight-line, no loop machinery.
        o_ref[...] = compute_rows(x_ref[...]).astype(o_ref.dtype)
    else:
        # Large tile: chunk the rows so h1/h2 temps stay small while the DMA tile is big.
        def body(c, carry):
            r = pl.multiple_of(c * chunk_b, chunk_b)
            out = compute_rows(x_ref[pl.ds(r, chunk_b), :])
            o_ref[pl.ds(r, chunk_b), :] = out.astype(o_ref.dtype)
            return carry

        lax.fori_loop(0, n_chunks, body, 0)


def _round_up(n, m):
    return ((n + m - 1) // m) * m


@functools.partial(jax.jit, static_argnames=("tile_b",))
def cdk_stages_forward(x, params, *, tile_b=DEFAULT_TILE_B):
    """x: [B, feature] float32.  params: dict of w1,b1,w2,b2,w3,b3 ([in,out] / [1,out])."""
    w1, b1 = params["w1"], params["b1"]
    w2, b2 = params["w2"], params["b2"]
    w3, b3 = params["w3"], params["b3"]

    B, feature = x.shape
    num_classes = w3.shape[1]

    # Pad class dim only to a sublane multiple (8), NOT to 128 lanes: keeps the
    # HBM-bound output path at ~32 B/row instead of 512 B/row.
    n_pad = _round_up(num_classes, SUBLANE)
    if n_pad != num_classes:
        w3 = jnp.zeros((w3.shape[0], n_pad), w3.dtype).at[:, :num_classes].set(w3)
        b3 = jnp.zeros((1, n_pad), b3.dtype).at[:, :num_classes].set(b3)

    # Batch tile: multiple of 8 sublanes; x is NOT padded — the trailing partial
    # block is masked by Pallas.
    tile_b = max(SUBLANE, min(tile_b, _round_up(B, SUBLANE)))
    tile_b = _round_up(tile_b, SUBLANE)
    chunk_b = CHUNK_B if tile_b % CHUNK_B == 0 else tile_b

    grid = (pl.cdiv(B, tile_b),)

    # Weights / biases stay VMEM-resident across every grid step.
    resident = lambda shape: pl.BlockSpec(shape, lambda i: (0,) * len(shape))

    out = pl.pallas_call(
        functools.partial(_mlp_kernel, chunk_b=chunk_b),
        out_shape=jax.ShapeDtypeStruct((B, n_pad), jnp.float32),
        grid=grid,
        in_specs=[
            pl.BlockSpec((tile_b, feature), lambda i: (i, 0)),   # streamed x tiles
            resident(w1.shape), resident(b1.shape),
            resident(w2.shape), resident(b2.shape),
            resident(w3.shape), resident(b3.shape),
        ],
        out_specs=pl.BlockSpec((tile_b, n_pad), lambda i: (i, 0)),
        compiler_params=pltpu.CompilerParams(
            dimension_semantics=("parallel",),
            vmem_limit_bytes=VMEM_LIMIT_BYTES,
        ),
    )(x, w1, b1, w2, b2, w3, b3)

    return out[:, :num_classes] if n_pad != num_classes else out


def init_params(key, feature, num_classes=5, hidden=HIDDEN):
    """Deterministic init mimicking PyTorch's default uniform(-1/sqrt(in), 1/sqrt(in))."""
    ks = jax.random.split(key, 6)

    def lin(kw, kb, fan_in, fan_out):
        bound = 1.0 / jnp.sqrt(jnp.float32(fan_in))
        w = jax.random.uniform(kw, (fan_in, fan_out), jnp.float32, -bound, bound)
        b = jax.random.uniform(kb, (1, fan_out), jnp.float32, -bound, bound)
        return w, b

    w1, b1 = lin(ks[0], ks[1], feature, hidden)
    w2, b2 = lin(ks[2], ks[3], hidden, hidden)
    w3, b3 = lin(ks[4], ks[5], hidden, num_classes)
    return {"w1": w1, "b1": b1, "w2": w2, "b2": b2, "w3": w3, "b3": b3}


def reference_forward(x, p):
    dot = lambda a, b: jnp.dot(a, b, precision=lax.Precision.HIGHEST)
    h = jnp.maximum(dot(x, p["w1"]) + p["b1"], 0.0)
    h = jnp.maximum(dot(h, p["w2"]) + p["b2"], 0.0)
    return dot(h, p["w3"]) + p["b3"]


if __name__ == "__main__":
    key = jax.random.PRNGKey(0)
    k_x1, k_x2, k_x3, k_p = jax.random.split(key, 4)

    feature, num_classes = 16, 5
    params = init_params(k_p, feature, num_classes)

    # Case 1: small aligned batch (single block, straight-line kernel path).
    x1 = jax.random.normal(k_x1, (8, feature), jnp.float32)
    out1 = jax.block_until_ready(cdk_stages_forward(x1, params))
    ref1 = reference_forward(x1, params)
    assert out1.shape == (8, num_classes)
    assert jnp.allclose(out1, ref1, atol=1e-5, rtol=1e-5)

    # Case 2: batch not a multiple of 8 (partial edge block, masked writeback, no x pad).
    x2 = jax.random.normal(k_x2, (11, feature), jnp.float32)
    out2 = jax.block_until_ready(cdk_stages_forward(x2, params))
    ref2 = reference_forward(x2, params)
    assert out2.shape == (11, num_classes)
    assert jnp.allclose(out2, ref2, atol=1e-5, rtol=1e-5)

    # Case 3: multi grid step + in-kernel chunk loop + partial trailing block.
    x3 = jax.random.normal(k_x3, (1537, feature), jnp.float32)
    out3 = jax.block_until_ready(cdk_stages_forward(x3, params, tile_b=1024))
    ref3 = reference_forward(x3, params)
    assert out3.shape == (1537, num_classes)
    assert jnp.allclose(out3, ref3, atol=1e-5, rtol=1e-5)

    print("KERNEL_OK")
</pallas_src>

<mosaic_0001>
module attributes {stable_mosaic.version = 11 : i64} {
  func.func @_mlp_kernel(%arg0: i32, %arg1: memref<8x16xf32, #tpu.memory_space<vmem>>, %arg2: memref<16x32xf32, #tpu.memory_space<vmem>>, %arg3: memref<1x32xf32, #tpu.memory_space<vmem>>, %arg4: memref<32x32xf32, #tpu.memory_space<vmem>>, %arg5: memref<1x32xf32, #tpu.memory_space<vmem>>, %arg6: memref<32x8xf32, #tpu.memory_space<vmem>>, %arg7: memref<1x8xf32, #tpu.memory_space<vmem>>, %arg8: memref<8x8xf32, #tpu.memory_space<vmem>>) attributes {dimension_semantics = [#tpu.dimension_semantics<parallel>], iteration_bounds = array<i64: 1>, scalar_prefetch = 0 : i64, scratch_operands = 0 : i64, tpu.core_type = #tpu.core_type<tc>, window_params = [{transform_indices = @transform_0, window_bounds = array<i64: 8, 16>}, {pipeline_mode = #tpu.pipeline_mode<synchronous>, transform_indices = @transform_1, window_bounds = array<i64: 16, 32>}, {pipeline_mode = #tpu.pipeline_mode<synchronous>, transform_indices = @transform_2, window_bounds = array<i64: 1, 32>}, {pipeline_mode = #tpu.pipeline_mode<synchronous>, transform_indices = @transform_3, window_bounds = array<i64: 32, 32>}, {pipeline_mode = #tpu.pipeline_mode<synchronous>, transform_indices = @transform_4, window_bounds = array<i64: 1, 32>}, {pipeline_mode = #tpu.pipeline_mode<synchronous>, transform_indices = @transform_5, window_bounds = array<i64: 32, 8>}, {pipeline_mode = #tpu.pipeline_mode<synchronous>, transform_indices = @transform_6, window_bounds = array<i64: 1, 8>}, {transform_indices = @transform_7, window_bounds = array<i64: 8, 8>}]} {
    %c0 = arith.constant 0 : index
    %c0_0 = arith.constant 0 : index
    %0 = vector.load %arg2[%c0, %c0_0] : memref<16x32xf32, #tpu.memory_space<vmem>>, vector<16x32xf32>
    %c0_1 = arith.constant 0 : index
    %c0_2 = arith.constant 0 : index
    %1 = vector.load %arg3[%c0_1, %c0_2] : memref<1x32xf32, #tpu.memory_space<vmem>>, vector<1x32xf32>
    %c0_3 = arith.constant 0 : index
    %c0_4 = arith.constant 0 : index
    %2 = vector.load %arg4[%c0_3, %c0_4] : memref<32x32xf32, #tpu.memory_space<vmem>>, vector<32x32xf32>
    %c0_5 = arith.constant 0 : index
    %c0_6 = arith.constant 0 : index
    %3 = vector.load %arg5[%c0_5, %c0_6] : memref<1x32xf32, #tpu.memory_space<vmem>>, vector<1x32xf32>
    %c0_7 = arith.constant 0 : index
    %c0_8 = arith.constant 0 : index
    %4 = vector.load %arg6[%c0_7, %c0_8] : memref<32x8xf32, #tpu.memory_space<vmem>>, vector<32x8xf32>
    %c0_9 = arith.constant 0 : index
    %c0_10 = arith.constant 0 : index
    %5 = vector.load %arg7[%c0_9, %c0_10] : memref<1x8xf32, #tpu.memory_space<vmem>>, vector<1x8xf32>
    %c0_11 = arith.constant 0 : index
    %c0_12 = arith.constant 0 : index
    %6 = vector.load %arg1[%c0_11, %c0_12] : memref<8x16xf32, #tpu.memory_space<vmem>>, vector<8x16xf32>
    %cst = arith.constant dense<0.000000e+00> : vector<8x32xf32>
    %7 = tpu.matmul %6, %0, %cst {dimension_numbers = #tpu.dot_dimension_numbers<[1], [0], [0], [1], [0, 0, 1, 1], [], []>, precision = #tpu.contract_precision<fp32>} : vector<8x16xf32>, vector<16x32xf32>, vector<8x32xf32> -> vector<8x32xf32>
    %8 = vector.broadcast %1 : vector<1x32xf32> to vector<8x32xf32>
    %9 = arith.addf %7, %8 : vector<8x32xf32>
    %cst_13 = arith.constant 0.000000e+00 : f32
    %10 = vector.broadcast %cst_13 : f32 to vector<8x32xf32>
    %11 = arith.maximumf %9, %10 : vector<8x32xf32>
    %cst_14 = arith.constant dense<0.000000e+00> : vector<8x32xf32>
    %12 = tpu.matmul %11, %2, %cst_14 {dimension_numbers = #tpu.dot_dimension_numbers<[1], [0], [0], [1], [0, 0, 1, 1], [], []>, precision = #tpu.contract_precision<fp32>} : vector<8x32xf32>, vector<32x32xf32>, vector<8x32xf32> -> vector<8x32xf32>
    %13 = vector.broadcast %3 : vector<1x32xf32> to vector<8x32xf32>
    %14 = arith.addf %12, %13 : vector<8x32xf32>
    %cst_15 = arith.constant 0.000000e+00 : f32
    %15 = vector.broadcast %cst_15 : f32 to vector<8x32xf32>
    %16 = arith.maximumf %14, %15 : vector<8x32xf32>
    %cst_16 = arith.constant dense<0.000000e+00> : vector<8x8xf32>
    %17 = tpu.matmul %16, %4, %cst_16 {dimension_numbers = #tpu.dot_dimension_numbers<[1], [0], [0], [1], [0, 0, 1, 1], [], []>, precision = #tpu.contract_precision<fp32>} : vector<8x32xf32>, vector<32x8xf32>, vector<8x8xf32> -> vector<8x8xf32>
    %18 = vector.broadcast %5 : vector<1x8xf32> to vector<8x8xf32>
    %19 = arith.addf %17, %18 : vector<8x8xf32>
    %c0_17 = arith.constant 0 : index
    %c0_18 = arith.constant 0 : index
    %20 = vector.load %arg8[%c0_17, %c0_18] : memref<8x8xf32, #tpu.memory_space<vmem>>, vector<8x8xf32>
    tpu.vector_store %arg8[%c0_17, %c0_18], %19 {strides = array<i32>} : memref<8x8xf32, #tpu.memory_space<vmem>>, vector<8x8xf32>,
    return
  }
  func.func @transform_0(%arg0: i32) -> (i32, i32) {
    %c0_i32 = arith.constant 0 : i32
    %c0_i32_0 = arith.constant 0 : i32
    return %arg0, %c0_i32 : i32, i32
  }
  func.func @transform_1(%arg0: i32) -> (i32, i32) {
    %c0_i32 = arith.constant 0 : i32
    %c0_i32_0 = arith.constant 0 : i32
    %c0_i32_1 = arith.constant 0 : i32
    return %c0_i32, %c0_i32_0 : i32, i32
  }
  func.func @transform_2(%arg0: i32) -> (i32, i32) {
    %c0_i32 = arith.constant 0 : i32
    %c0_i32_0 = arith.constant 0 : i32
    %c0_i32_1 = arith.constant 0 : i32
    return %c0_i32, %c0_i32_0 : i32, i32
  }
  func.func @transform_3(%arg0: i32) -> (i32, i32) {
    %c0_i32 = arith.constant 0 : i32
    %c0_i32_0 = arith.constant 0 : i32
    %c0_i32_1 = arith.constant 0 : i32
    return %c0_i32, %c0_i32_0 : i32, i32
  }
  func.func @transform_4(%arg0: i32) -> (i32, i32) {
    %c0_i32 = arith.constant 0 : i32
    %c0_i32_0 = arith.constant 0 : i32
    %c0_i32_1 = arith.constant 0 : i32
    return %c0_i32, %c0_i32_0 : i32, i32
  }
  func.func @transform_5(%arg0: i32) -> (i32, i32) {
    %c0_i32 = arith.constant 0 : i32
    %c0_i32_0 = arith.constant 0 : i32
    %c0_i32_1 = arith.constant 0 : i32
    return %c0_i32, %c0_i32_0 : i32, i32
  }
  func.func @transform_6(%arg0: i32) -> (i32, i32) {
    %c0_i32 = arith.constant 0 : i32
    %c0_i32_0 = arith.constant 0 : i32
    %c0_i32_1 = arith.constant 0 : i32
    return %c0_i32, %c0_i32_0 : i32, i32
  }
  func.func @transform_7(%arg0: i32) -> (i32, i32) {
    %c0_i32 = arith.constant 0 : i32
    %c0_i32_0 = arith.constant 0 : i32
    return %arg0, %c0_i32 : i32, i32
  }
}

</mosaic_0001>

<llo_original>
// kernel: cdk_stages_forward.1
$region0: #{cdk_stages_forward.1}
  #allocation0 [shape = 'u32[]', space=smem, size = 0x4, offset = 0x4, fixed_abs, tag = 'smem constant byte address 0x4 - core index']
  #allocation1 [shape = 'u32[144,128]{1,0:T(1,128)}', space=vmem, size = 0x12000, scoped, tag = 'internal scratch']
  %s0 = inlined_call_operand.vmem [shape: f32[8,16], index: 0, kind: input, shape index: {}]
  %s1 = inlined_call_operand.vmem [shape: f32[16,32], index: 1, kind: input, shape index: {}]
  %s2 = inlined_call_operand.vmem [shape: f32[1,32], index: 2, kind: input, shape index: {}]
  %s3 = inlined_call_operand.vmem [shape: f32[32,32], index: 3, kind: input, shape index: {}]
  %s4 = inlined_call_operand.vmem [shape: f32[1,32], index: 4, kind: input, shape index: {}]
  %s5 = inlined_call_operand.vmem [shape: f32[32,8], index: 5, kind: input, shape index: {}]
  %s6 = inlined_call_operand.vmem [shape: f32[1,8], index: 6, kind: input, shape index: {}]
  %s7 = inlined_call_operand.hbm [shape: f32[8,8], index: 7, kind: output, shape index: {}]
  %s8 = sld [smem:[#allocation0]]
  $region38: #{cdk_stages_forward.1} parent=0
    _
  %s10 = ssub.s32 1, %s8
  %s11 = scalar_select 0, %s10, %s8
  $region1: #{cdk_stages_forward.1} parent=0
    #allocation2 [shape = 'u8[4096]{0}', space=vmem, size = 0x1000, scoped, tag = 'output window, operand 0, single buffered']
    #allocation3 [shape = 's32[1]{0}', space=sflag, size = 0x4, scoped, tag = 'scoped memory for cdk_stages_forward.1']
    %12 = vsyncpa [#allocation3], 0
    // Predicated region
    $region2: #{cdk_stages_forward.1} parent=1 // pred_check
      _
    $region3: #{cdk_stages_forward.1} parent=1 // pred_check_branch
      %14 = sbr.rel (0) target = $region5
    $region4: #{cdk_stages_forward.1} parent=1 // pred_region
      _
    $region5: #{cdk_stages_forward.1} parent=1 // pred_fallthru
      _
    // Predicated region
    $region6: #{cdk_stages_forward.1} parent=1 // pred_check
      _
    $region7: #{cdk_stages_forward.1} parent=1 // pred_check_branch
      %16 = sbr.rel (0) target = $region9
    $region8: #{cdk_stages_forward.1} parent=1 // pred_region
      _
    $region9: #{cdk_stages_forward.1} parent=1 // pred_fallthru
      _
    // Predicated region
    $region10: #{cdk_stages_forward.1} parent=1 // pred_check
      _
    $region11: #{cdk_stages_forward.1} parent=1 // pred_check_branch
      %18 = sbr.rel (0) target = $region13
    $region12: #{cdk_stages_forward.1} parent=1 // pred_region
      _
    $region13: #{cdk_stages_forward.1} parent=1 // pred_fallthru
      _
    // Predicated region
    $region14: #{cdk_stages_forward.1} parent=1 // pred_check
      _
    $region15: #{cdk_stages_forward.1} parent=1 // pred_check_branch
      %20 = sbr.rel (0) target = $region17
    $region16: #{cdk_stages_forward.1} parent=1 // pred_region
      _
    $region17: #{cdk_stages_forward.1} parent=1 // pred_fallthru
      _
    // Predicated region
    $region18: #{cdk_stages_forward.1} parent=1 // pred_check
      _
    $region19: #{cdk_stages_forward.1} parent=1 // pred_check_branch
      %22 = sbr.rel (0) target = $region21
    $region20: #{cdk_stages_forward.1} parent=1 // pred_region
      _
    $region21: #{cdk_stages_forward.1} parent=1 // pred_fallthru
      _
    // Predicated region
    $region22: #{cdk_stages_forward.1} parent=1 // pred_check
      _
    $region23: #{cdk_stages_forward.1} parent=1 // pred_check_branch
      %24 = sbr.rel (0) target = $region25
    $region24: #{cdk_stages_forward.1} parent=1 // pred_region
      _
    $region25: #{cdk_stages_forward.1} parent=1 // pred_fallthru
      _
    // Predicated region
    $region26: #{cdk_stages_forward.1} parent=1 // pred_check
      _
    $region27: #{cdk_stages_forward.1} parent=1 // pred_check_branch
      %26 = sbr.rel (0) target = $region29
    $region28: #{cdk_stages_forward.1} parent=1 // pred_region
      _
    $region29: #{cdk_stages_forward.1} parent=1 // pred_fallthru
      _
    %v27 = vld [vmem:[%s1] sm:$0xff]
    %v28 = vld [vmem:[%s1 + $0x8] sm:$0xff]
    %v29 = vld [vmem:[%s2] sm:$0x1]
    %v30 = vld [vmem:[%s3] sm:$0xff]
    %v31 = vld [vmem:[%s3 + $0x8] sm:$0xff]
    %v32 = vld [vmem:[%s3 + $0x10] sm:$0xff]
    %v33 = vld [vmem:[%s3 + $0x18] sm:$0xff]
    %v34 = vld [vmem:[%s4] sm:$0x1]
    %v35 = vld [vmem:[%s5] sm:$0xff]
    %v36 = vld [vmem:[%s5 + $0x8] sm:$0xff]
    %v37 = vld [vmem:[%s5 + $0x10] sm:$0xff]
    %v38 = vld [vmem:[%s5 + $0x18] sm:$0xff]
    %v39 = vld [vmem:[%s6] sm:$0x1]
    %v40 = vld [vmem:[%s0] sm:$0xff]
    %v42 = vlaneseq
    %v43 = vshrl.u32 %v42, 7
    %v44 = vsub.s32 0, %v43
    %v45 = vrot.slane %v29, %v44
    %vm47 = vcmask 130048
    %v49 = vsel %vm47, %v40, 0
    %51 = vmatprep.subr.mxu0 0.0
    %v52 = vand.u32 %v27, 4294901760
    %53 = vmatpush1.msra.mxu0 %v52
    %54 = vmatprep.subr.mxu0 0.0
    %v55 = vand.u32 %v28, 4294901760
    %56 = vmatpush1.msra.mxu0 %v55
    %57 = vmatprep.subr.mxu0 0.0
    %58 = vmatpush1.msra.mxu0 0.0
    %59 = vmatprep.subr.mxu0 0.0
    %60 = vmatpush1.msra.mxu0 0.0
    %61 = vmatprep.subr.mxu0 0.0
    %62 = vmatpush1.msra.mxu0 0.0
    %63 = vmatprep.subr.mxu0 0.0
    %64 = vmatpush1.msra.mxu0 0.0
    %65 = vmatprep.subr.mxu0 0.0
    %66 = vmatpush1.msra.mxu0 0.0
    %67 = vmatprep.subr.mxu0 0.0
    %68 = vmatpush1.msra.mxu0 0.0
    %69 = vmatprep.subr.mxu0 0.0
    %70 = vmatpush1.msra.mxu0 0.0
    %71 = vmatprep.subr.mxu0 0.0
    %72 = vmatpush1.msra.mxu0 0.0
    %73 = vmatprep.subr.mxu0 0.0
    %74 = vmatpush1.msra.mxu0 0.0
    %75 = vmatprep.subr.mxu0 0.0
    %76 = vmatpush1.msra.mxu0 0.0
    %77 = vmatprep.subr.mxu0 0.0
    %78 = vmatpush1.msra.mxu0 0.0
    %79 = vmatprep.subr.mxu0 0.0
    %80 = vmatpush1.msra.mxu0 0.0
    %81 = vmatprep.subr.mxu0 0.0
    %82 = vmatpush1.msra.mxu0 0.0
    %83 = vmatprep.subr.mxu0 0.0
    %84 = vmatpush1.msra.mxu0 0.0
    %85 = vmatprep.subr.mxu0 0.0
    %86 = vmatpush1.msra.mxu0 0.0
    %87 = vmatprep.subr.mxu0 0.0
    %88 = vmatpush1.msra.mxu0 0.0
    %89 = vmatprep.subr.mxu0 0.0
    %90 = vmatpush1.msra.mxu0 0.0
    %91 = vmatprep.subr.mxu0 0.0
    %92 = vmatpush1.msra.mxu0 0.0
    %93 = vmatprep.subr.mxu0 0.0
    %94 = vmatpush1.msra.mxu0 0.0
    %95 = vmatprep.subr.mxu0 0.0
    %96 = vmatpush1.msra.mxu0 0.0
    %97 = vmatprep.subr.mxu0 0.0
    %98 = vmatpush1.msra.mxu0 0.0
    %99 = vmatprep.subr.mxu0 0.0
    %100 = vmatpush1.msra.mxu0 0.0
    %101 = vmatprep.subr.mxu0 0.0
    %102 = vmatpush1.msra.mxu0 0.0
    %103 = vmatprep.subr.mxu0 0.0
    %104 = vmatpush1.msra.mxu0 0.0
    %105 = vmatprep.subr.mxu0 0.0
    %106 = vmatpush1.msra.mxu0 0.0
    %107 = vmatprep.subr.mxu0 0.0
    %108 = vmatpush1.msra.mxu0 0.0
    %109 = vmatprep.subr.mxu0 0.0
    %110 = vmatpush1.msra.mxu0 0.0
    %111 = vmatprep.subr.mxu0 0.0
    %112 = vmatpush1.msra.mxu0 0.0
    %113 = vmatprep.subr.mxu0 0.0
    %114 = vmatpush1.msra.mxu0 0.0
    %115 = vmatprep.subr.mxu0 0.0
    %116 = vmatpush1.msra.mxu0 0.0
    %117 = vmatprep.mubr.f32.mxu0 0.0
    %v118 = vand.u32 %v49, 4294901760
    %v119 = vsub.f32 %v49, %v118
    %v120 = vand.u32 %v119, 4294901760
    %v121 = vsub.f32 %v119, %v120
    %v122 = vand.u32 %v121, 4294901760
    %123 = vmatmul.mubr.f32.gmra.mrb[0].mxu0 %v122
    %v124 = vpop.f32.mrb[0].mxu0
    %v125 = vadd.f32 %v45, %v124
    %v126 = vpop.f32.mrb[0].mxu0
    %127 = vdwg.mxu0
    %128 = vmatprep.subr.mxu0 0.0
    %v129 = vand.u32 %v27, 4294901760
    %v130 = vsub.f32 %v27, %v129
    %v131 = vand.u32 %v130, 4294901760
    %v132 = vsub.f32 %v130, %v131
    %v133 = vand.u32 %v132, 4294901760
    %134 = vmatpush1.msra.mxu0 %v133
    %135 = vmatprep.subr.mxu0 0.0
    %v136 = vand.u32 %v28, 4294901760
    %v137 = vsub.f32 %v28, %v136
    %v138 = vand.u32 %v137, 4294901760
    %v139 = vsub.f32 %v137, %v138
    %v140 = vand.u32 %v139, 4294901760
    %141 = vmatpush1.msra.mxu0 %v140
    %142 = vmatprep.subr.mxu0 0.0
    %143 = vmatpush1.msra.mxu0 0.0
    %144 = vmatprep.subr.mxu0 0.0
    %145 = vmatpush1.msra.mxu0 0.0
    %146 = vmatprep.subr.mxu0 0.0
    %147 = vmatpush1.msra.mxu0 0.0
    %148 = vmatprep.subr.mxu0 0.0
    %149 = vmatpush1.msra.mxu0 0.0
    %150 = vmatprep.subr.mxu0 0.0
    %151 = vmatpush1.msra.mxu0 0.0
    %152 = vmatprep.subr.mxu0 0.0
    %153 = vmatpush1.msra.mxu0 0.0
    %154 = vmatprep.subr.mxu0 0.0
    %155 = vmatpush1.msra.mxu0 0.0
    %156 = vmatprep.subr.mxu0 0.0
    %157 = vmatpush1.msra.mxu0 0.0
    %158 = vmatprep.subr.mxu0 0.0
    %159 = vmatpush1.msra.mxu0 0.0
    %160 = vmatprep.subr.mxu0 0.0
    %161 = vmatpush1.msra.mxu0 0.0
    %162 = vmatprep.subr.mxu0 0.0
    %163 = vmatpush1.msra.mxu0 0.0
    %164 = vmatprep.subr.mxu0 0.0
    %165 = vmatpush1.msra.mxu0 0.0
    %166 = vmatprep.subr.mxu0 0.0
    %167 = vmatpush1.msra.mxu0 0.0
    %168 = vmatprep.subr.mxu0 0.0
    %169 = vmatpush1.msra.mxu0 0.0
    %170 = vmatprep.subr.mxu0 0.0
    %171 = vmatpush1.msra.mxu0 0.0
    %172 = vmatprep.subr.mxu0 0.0
    %173 = vmatpush1.msra.mxu0 0.0
    %174 = vmatprep.subr.mxu0 0.0
    %175 = vmatpush1.msra.mxu0 0.0
    %176 = vmatprep.subr.mxu0 0.0
    %177 = vmatpush1.msra.mxu0 0.0
    %178 = vmatprep.subr.mxu0 0.0
    %179 = vmatpush1.msra.mxu0 0.0
    %180 = vmatprep.subr.mxu0 0.0
    %181 = vmatpush1.msra.mxu0 0.0
    %182 = vmatprep.subr.mxu0 0.0
    %183 = vmatpush1.msra.mxu0 0.0
    %184 = vmatprep.subr.mxu0 0.0
    %185 = vmatpush1.msra.mxu0 0.0
    %186 = vmatprep.subr.mxu0 0.0
    %187 = vmatpush1.msra.mxu0 0.0
    %188 = vmatprep.subr.mxu0 0.0
    %189 = vmatpush1.msra.mxu0 0.0
    %190 = vmatprep.subr.mxu0 0.0
    %191 = vmatpush1.msra.mxu0 0.0
    %192 = vmatprep.subr.mxu0 0.0
    %193 = vmatpush1.msra.mxu0 0.0
    %194 = vmatprep.subr.mxu0 0.0
    %195 = vmatpush1.msra.mxu0 0.0
    %196 = vmatprep.subr.mxu0 0.0
    %197 = vmatpush1.msra.mxu0 0.0
    %198 = vmatprep.subr.mxu0 0.0
    %199 = vmatpush1.msra.mxu0 0.0
    %200 = vmatprep.subr.mxu0 0.0
    %201 = vmatpush1.msra.mxu0 0.0
    %202 = vmatprep.mubr.f32.mxu0 0.0
    %v203 = vand.u32 %v49, 4294901760
    %204 = vmatmul.mubr.f32.gmra.mrb[0].mxu0 %v203
    %v205 = vpop.f32.mrb[0].mxu0
    %v206 = vadd.f32 %v125, %v205
    %v207 = vpop.f32.mrb[0].mxu0
    %208 = vdwg.mxu0
    %209 = vmatprep.subr.mxu0 0.0
    %v210 = vand.u32 %v27, 4294901760
    %v211 = vsub.f32 %v27, %v210
    %212 = vmatpush1.msra.mxu0 %v211
    %213 = vmatprep.subr.mxu0 0.0
    %v214 = vand.u32 %v28, 4294901760
    %v215 = vsub.f32 %v28, %v214
    %216 = vmatpush1.msra.mxu0 %v215
    %217 = vmatprep.subr.mxu0 0.0
    %218 = vmatpush1.msra.mxu0 0.0
    %219 = vmatprep.subr.mxu0 0.0
    %220 = vmatpush1.msra.mxu0 0.0
    %221 = vmatprep.subr.mxu0 0.0
    %222 = vmatpush1.msra.mxu0 0.0
    %223 = vmatprep.subr.mxu0 0.0
    %224 = vmatpush1.msra.mxu0 0.0
    %225 = vmatprep.subr.mxu0 0.0
    %226 = vmatpush1.msra.mxu0 0.0
    %227 = vmatprep.subr.mxu0 0.0
    %228 = vmatpush1.msra.mxu0 0.0
    %229 = vmatprep.subr.mxu0 0.0
    %230 = vmatpush1.msra.mxu0 0.0
    %231 = vmatprep.subr.mxu0 0.0
    %232 = vmatpush1.msra.mxu0 0.0
    %233 = vmatprep.subr.mxu0 0.0
    %234 = vmatpush1.msra.mxu0 0.0
    %235 = vmatprep.subr.mxu0 0.0
    %236 = vmatpush1.msra.mxu0 0.0
    %237 = vmatprep.subr.mxu0 0.0
    %238 = vmatpush1.msra.mxu0 0.0
    %239 = vmatprep.subr.mxu0 0.0
    %240 = vmatpush1.msra.mxu0 0.0
    %241 = vmatprep.subr.mxu0 0.0
    %242 = vmatpush1.msra.mxu0 0.0
    %243 = vmatprep.subr.mxu0 0.0
    %244 = vmatpush1.msra.mxu0 0.0
    %245 = vmatprep.subr.mxu0 0.0
    %246 = vmatpush1.msra.mxu0 0.0
    %247 = vmatprep.subr.mxu0 0.0
    %248 = vmatpush1.msra.mxu0 0.0
    %249 = vmatprep.subr.mxu0 0.0
    %250 = vmatpush1.msra.mxu0 0.0
    %251 = vmatprep.subr.mxu0 0.0
    %252 = vmatpush1.msra.mxu0 0.0
    %253 = vmatprep.subr.mxu0 0.0
    %254 = vmatpush1.msra.mxu0 0.0
    %255 = vmatprep.subr.mxu0 0.0
    %256 = vmatpush1.msra.mxu0 0.0
    %257 = vmatprep.subr.mxu0 0.0
    %258 = vmatpush1.msra.mxu0 0.0
    %259 = vmatprep.subr.mxu0 0.0
    %260 = vmatpush1.msra.mxu0 0.0
    %261 = vmatprep.subr.mxu0 0.0
    %262 = vmatpush1.msra.mxu0 0.0
    %263 = vmatprep.subr.mxu0 0.0
    %264 = vmatpush1.msra.mxu0 0.0
    %265 = vmatprep.subr.mxu0 0.0
    %266 = vmatpush1.msra.mxu0 0.0
    %267 = vmatprep.subr.mxu0 0.0
    %268 = vmatpush1.msra.mxu0 0.0
    %269 = vmatprep.subr.mxu0 0.0
    %270 = vmatpush1.msra.mxu0 0.0
    %271 = vmatprep.subr.mxu0 0.0
    %272 = vmatpush1.msra.mxu0 0.0
    %273 = vmatprep.subr.mxu0 0.0
    %274 = vmatpush1.msra.mxu0 0.0
    %275 = vmatprep.subr.mxu0 0.0
    %276 = vmatpush1.msra.mxu0 0.0
    %277 = vmatprep.mubr.f32.mxu0 0.0
    %v278 = vand.u32 %v49, 4294901760
    %v279 = vsub.f32 %v49, %v278
    %280 = vmatmul.mubr.f32.gmra.mrb[0].mxu0 %v279
    %v281 = vpop.f32.mrb[0].mxu0
    %v282 = vadd.f32 %v206, %v281
    %v283 = vpop.f32.mrb[0].mxu0
    %284 = vdwg.mxu0
    %285 = vmatprep.subr.mxu0 0.0
    %v286 = vand.u32 %v27, 4294901760
    %287 = vmatpush1.msra.mxu0 %v286
    %288 = vmatprep.subr.mxu0 0.0
    %v289 = vand.u32 %v28, 4294901760
    %290 = vmatpush1.msra.mxu0 %v289
    %291 = vmatprep.subr.mxu0 0.0
    %292 = vmatpush1.msra.mxu0 0.0
    %293 = vmatprep.subr.mxu0 0.0
    %294 = vmatpush1.msra.mxu0 0.0
    %295 = vmatprep.subr.mxu0 0.0
    %296 = vmatpush1.msra.mxu0 0.0
    %297 = vmatprep.subr.mxu0 0.0
    %298 = vmatpush1.msra.mxu0 0.0
    %299 = vmatprep.subr.mxu0 0.0
    %300 = vmatpush1.msra.mxu0 0.0
    %301 = vmatprep.subr.mxu0 0.0
    %302 = vmatpush1.msra.mxu0 0.0
    %303 = vmatprep.subr.mxu0 0.0
    %304 = vmatpush1.msra.mxu0 0.0
    %305 = vmatprep.subr.mxu0 0.0
    %306 = vmatpush1.msra.mxu0 0.0
    %307 = vmatprep.subr.mxu0 0.0
    %308 = vmatpush1.msra.mxu0 0.0
    %309 = vmatprep.subr.mxu0 0.0
    %310 = vmatpush1.msra.mxu0 0.0
    %311 = vmatprep.subr.mxu0 0.0
    %312 = vmatpush1.msra.mxu0 0.0
    %313 = vmatprep.subr.mxu0 0.0
    %314 = vmatpush1.msra.mxu0 0.0
    %315 = vmatprep.subr.mxu0 0.0
    %316 = vmatpush1.msra.mxu0 0.0
    %317 = vmatprep.subr.mxu0 0.0
    %318 = vmatpush1.msra.mxu0 0.0
    %319 = vmatprep.subr.mxu0 0.0
    %320 = vmatpush1.msra.mxu0 0.0
    %321 = vmatprep.subr.mxu0 0.0
    %322 = vmatpush1.msra.mxu0 0.0
    %323 = vmatprep.subr.mxu0 0.0
    %324 = vmatpush1.msra.mxu0 0.0
    %325 = vmatprep.subr.mxu0 0.0
    %326 = vmatpush1.msra.mxu0 0.0
    %327 = vmatprep.subr.mxu0 0.0
    %328 = vmatpush1.msra.mxu0 0.0
    %329 = vmatprep.subr.mxu0 0.0
    %330 = vmatpush1.msra.mxu0 0.0
    %331 = vmatprep.subr.mxu0 0.0
    %332 = vmatpush1.msra.mxu0 0.0
    %333 = vmatprep.subr.mxu0 0.0
    %334 = vmatpush1.msra.mxu0 0.0
    %335 = vmatprep.subr.mxu0 0.0
    %336 = vmatpush1.msra.mxu0 0.0
    %337 = vmatprep.subr.mxu0 0.0
    %338 = vmatpush1.msra.mxu0 0.0
    %339 = vmatprep.subr.mxu0 0.0
    %340 = vmatpush1.msra.mxu0 0.0
    %341 = vmatprep.subr.mxu0 0.0
    %342 = vmatpush1.msra.mxu0 0.0
    %343 = vmatprep.subr.mxu0 0.0
    %344 = vmatpush1.msra.mxu0 0.0
    %345 = vmatprep.subr.mxu0 0.0
    %346 = vmatpush1.msra.mxu0 0.0
    %347 = vmatprep.subr.mxu0 0.0
    %348 = vmatpush1.msra.mxu0 0.0
    %349 = vmatprep.subr.mxu0 0.0
    %350 = vmatpush1.msra.mxu0 0.0
    %351 = vmatprep.mubr.f32.mxu0 0.0
    %v352 = vand.u32 %v49, 4294901760
    %v353 = vsub.f32 %v49, %v352
    %v354 = vand.u32 %v353, 4294901760
    %355 = vmatmul.mubr.f32.gmra.mrb[0].mxu0 %v354
    %v356 = vpop.f32.mrb[0].mxu0
    %v357 = vadd.f32 %v282, %v356
    %v358 = vpop.f32.mrb[0].mxu0
    %359 = vdwg.mxu0
    %360 = vmatprep.subr.mxu0 0.0
    %v361 = vand.u32 %v27, 4294901760
    %v362 = vsub.f32 %v27, %v361
    %v363 = vand.u32 %v362, 4294901760
    %364 = vmatpush1.msra.mxu0 %v363
    %365 = vmatprep.subr.mxu0 0.0
    %v366 = vand.u32 %v28, 4294901760
    %v367 = vsub.f32 %v28, %v366
    %v368 = vand.u32 %v367, 4294901760
    %369 = vmatpush1.msra.mxu0 %v368
    %370 = vmatprep.subr.mxu0 0.0
    %371 = vmatpush1.msra.mxu0 0.0
    %372 = vmatprep.subr.mxu0 0.0
    %373 = vmatpush1.msra.mxu0 0.0
    %374 = vmatprep.subr.mxu0 0.0
    %375 = vmatpush1.msra.mxu0 0.0
    %376 = vmatprep.subr.mxu0 0.0
    %377 = vmatpush1.msra.mxu0 0.0
    %378 = vmatprep.subr.mxu0 0.0
    %379 = vmatpush1.msra.mxu0 0.0
    %380 = vmatprep.subr.mxu0 0.0
    %381 = vmatpush1.msra.mxu0 0.0
    %382 = vmatprep.subr.mxu0 0.0
    %383 = vmatpush1.msra.mxu0 0.0
    %384 = vmatprep.subr.mxu0 0.0
    %385 = vmatpush1.msra.mxu0 0.0
    %386 = vmatprep.subr.mxu0 0.0
    %387 = vmatpush1.msra.mxu0 0.0
    %388 = vmatprep.subr.mxu0 0.0
    %389 = vmatpush1.msra.mxu0 0.0
    %390 = vmatprep.subr.mxu0 0.0
    %391 = vmatpush1.msra.mxu0 0.0
    %392 = vmatprep.subr.mxu0 0.0
    %393 = vmatpush1.msra.mxu0 0.0
    %394 = vmatprep.subr.mxu0 0.0
    %395 = vmatpush1.msra.mxu0 0.0
    %396 = vmatprep.subr.mxu0 0.0
    %397 = vmatpush1.msra.mxu0 0.0
    %398 = vmatprep.subr.mxu0 0.0
    %399 = vmatpush1.msra.mxu0 0.0
    %400 = vmatprep.subr.mxu0 0.0
    %401 = vmatpush1.msra.mxu0 0.0
    %402 = vmatprep.subr.mxu0 0.0
    %403 = vmatpush1.msra.mxu0 0.0
    %404 = vmatprep.subr.mxu0 0.0
    %405 = vmatpush1.msra.mxu0 0.0
    %406 = vmatprep.subr.mxu0 0.0
    %407 = vmatpush1.msra.mxu0 0.0
    %408 = vmatprep.subr.mxu0 0.0
    %409 = vmatpush1.msra.mxu0 0.0
    %410 = vmatprep.subr.mxu0 0.0
    %411 = vmatpush1.msra.mxu0 0.0
    %412 = vmatprep.subr.mxu0 0.0
    %413 = vmatpush1.msra.mxu0 0.0
    %414 = vmatprep.subr.mxu0 0.0
    %415 = vmatpush1.msra.mxu0 0.0
    %416 = vmatprep.subr.mxu0 0.0
    %417 = vmatpush1.msra.mxu0 0.0
    %418 = vmatprep.subr.mxu0 0.0
    %419 = vmatpush1.msra.mxu0 0.0
    %420 = vmatprep.subr.mxu0 0.0
    %421 = vmatpush1.msra.mxu0 0.0
    %422 = vmatprep.subr.mxu0 0.0
    %423 = vmatpush1.msra.mxu0 0.0
    %424 = vmatprep.subr.mxu0 0.0
    %425 = vmatpush1.msra.mxu0 0.0
    %426 = vmatprep.subr.mxu0 0.0
    %427 = vmatpush1.msra.mxu0 0.0
    %428 = vmatprep.subr.mxu0 0.0
    %429 = vmatpush1.msra.mxu0 0.0
    %430 = vmatprep.mubr.f32.mxu0 0.0
    %v431 = vand.u32 %v49, 4294901760
    %432 = vmatmul.mubr.f32.gmra.mrb[0].mxu0 %v431
    %v433 = vpop.f32.mrb[0].mxu0
    %v434 = vadd.f32 %v357, %v433
    %v435 = vpop.f32.mrb[0].mxu0
    %436 = vdwg.mxu0
    %437 = vmatprep.subr.mxu0 0.0
    %v438 = vand.u32 %v27, 4294901760
    %439 = vmatpush1.msra.mxu0 %v438
    %440 = vmatprep.subr.mxu0 0.0
    %v441 = vand.u32 %v28, 4294901760
    %442 = vmatpush1.msra.mxu0 %v441
    %443 = vmatprep.subr.mxu0 0.0
    %444 = vmatpush1.msra.mxu0 0.0
    %445 = vmatprep.subr.mxu0 0.0
    %446 = vmatpush1.msra.mxu0 0.0
    %447 = vmatprep.subr.mxu0 0.0
    %448 = vmatpush1.msra.mxu0 0.0
    %449 = vmatprep.subr.mxu0 0.0
    %450 = vmatpush1.msra.mxu0 0.0
    %451 = vmatprep.subr.mxu0 0.0
    %452 = vmatpush1.msra.mxu0 0.0
    %453 = vmatprep.subr.mxu0 0.0
    %454 = vmatpush1.msra.mxu0 0.0
    %455 = vmatprep.subr.mxu0 0.0
    %456 = vmatpush1.msra.mxu0 0.0
    %457 = vmatprep.subr.mxu0 0.0
    %458 = vmatpush1.msra.mxu0 0.0
    %459 = vmatprep.subr.mxu0 0.0
    %460 = vmatpush1.msra.mxu0 0.0
    %461 = vmatprep.subr.mxu0 0.0
    %462 = vmatpush1.msra.mxu0 0.0
    %463 = vmatprep.subr.mxu0 0.0
    %464 = vmatpush1.msra.mxu0 0.0
    %465 = vmatprep.subr.mxu0 0.0
    %466 = vmatpush1.msra.mxu0 0.0
    %467 = vmatprep.subr.mxu0 0.0
    %468 = vmatpush1.msra.mxu0 0.0
    %469 = vmatprep.subr.mxu0 0.0
    %470 = vmatpush1.msra.mxu0 0.0
    %471 = vmatprep.subr.mxu0 0.0
    %472 = vmatpush1.msra.mxu0 0.0
    %473 = vmatprep.subr.mxu0 0.0
    %474 = vmatpush1.msra.mxu0 0.0
    %475 = vmatprep.subr.mxu0 0.0
    %476 = vmatpush1.msra.mxu0 0.0
    %477 = vmatprep.subr.mxu0 0.0
    %478 = vmatpush1.msra.mxu0 0.0
    %479 = vmatprep.subr.mxu0 0.0
    %480 = vmatpush1.msra.mxu0 0.0
    %481 = vmatprep.subr.mxu0 0.0
    %482 = vmatpush1.msra.mxu0 0.0
    %483 = vmatprep.subr.mxu0 0.0
    %484 = vmatpush1.msra.mxu0 0.0
    %485 = vmatprep.subr.mxu0 0.0
    %486 = vmatpush1.msra.mxu0 0.0
    %487 = vmatprep.subr.mxu0 0.0
    %488 = vmatpush1.msra.mxu0 0.0
    %489 = vmatprep.subr.mxu0 0.0
    %490 = vmatpush1.msra.mxu0 0.0
    %491 = vmatprep.subr.mxu0 0.0
    %492 = vmatpush1.msra.mxu0 0.0
    %493 = vmatprep.subr.mxu0 0.0
    %494 = vmatpush1.msra.mxu0 0.0
    %495 = vmatprep.subr.mxu0 0.0
    %496 = vmatpush1.msra.mxu0 0.0
    %497 = vmatprep.subr.mxu0 0.0
    %498 = vmatpush1.msra.mxu0 0.0
    %499 = vmatprep.subr.mxu0 0.0
    %500 = vmatpush1.msra.mxu0 0.0
    %501 = vmatprep.subr.mxu0 0.0
    %502 = vmatpush1.msra.mxu0 0.0
    %503 = vmatprep.mubr.f32.mxu0 0.0
    %v504 = vand.u32 %v49, 4294901760
    %505 = vmatmul.mubr.f32.gmra.mrb[0].mxu0 %v504
    %v506 = vpop.f32.mrb[0].mxu0
    %v507 = vadd.f32 %v434, %v506
    %v508 = vpop.f32.mrb[0].mxu0
    %509 = vdwg.mxu0
    %v510 = vmax.f32 %v507, 0.0
    %v512 = vlaneseq
    %v513 = vshrl.u32 %v512, 7
    %v514 = vsub.s32 0, %v513
    %v515 = vrot.slane %v34, %v514
    %vm517 = vcmask 261120
    %v519 = vsel %vm517, %v510, 0
    %521 = vmatprep.subr.mxu0 0.0
    %v522 = vand.u32 %v30, 4294901760
    %523 = vmatpush1.msra.mxu0 %v522
    %524 = vmatprep.subr.mxu0 0.0
    %v525 = vand.u32 %v31, 4294901760
    %526 = vmatpush1.msra.mxu0 %v525
    %527 = vmatprep.subr.mxu0 0.0
    %v528 = vand.u32 %v32, 4294901760
    %529 = vmatpush1.msra.mxu0 %v528
    %530 = vmatprep.subr.mxu0 0.0
    %v531 = vand.u32 %v33, 4294901760
    %532 = vmatpush1.msra.mxu0 %v531
    %533 = vmatprep.subr.mxu0 0.0
    %534 = vmatpush1.msra.mxu0 0.0
    %535 = vmatprep.subr.mxu0 0.0
    %536 = vmatpush1.msra.mxu0 0.0
    %537 = vmatprep.subr.mxu0 0.0
    %538 = vmatpush1.msra.mxu0 0.0
    %539 = vmatprep.subr.mxu0 0.0
    %540 = vmatpush1.msra.mxu0 0.0
    %541 = vmatprep.subr.mxu0 0.0
    %542 = vmatpush1.msra.mxu0 0.0
    %543 = vmatprep.subr.mxu0 0.0
    %544 = vmatpush1.msra.mxu0 0.0
    %545 = vmatprep.subr.mxu0 0.0
    %546 = vmatpush1.msra.mxu0 0.0
    %547 = vmatprep.subr.mxu0 0.0
    %548 = vmatpush1.msra.mxu0 0.0
    %549 = vmatprep.subr.mxu0 0.0
    %550 = vmatpush1.msra.mxu0 0.0
    %551 = vmatprep.subr.mxu0 0.0
    %552 = vmatpush1.msra.mxu0 0.0
    %553 = vmatprep.subr.mxu0 0.0
    %554 = vmatpush1.msra.mxu0 0.0
    %555 = vmatprep.subr.mxu0 0.0
    %556 = vmatpush1.msra.mxu0 0.0
    %557 = vmatprep.subr.mxu0 0.0
    %558 = vmatpush1.msra.mxu0 0.0
    %559 = vmatprep.subr.mxu0 0.0
    %560 = vmatpush1.msra.mxu0 0.0
    %561 = vmatprep.subr.mxu0 0.0
    %562 = vmatpush1.msra.mxu0 0.0
    %563 = vmatprep.subr.mxu0 0.0
    %564 = vmatpush1.msra.mxu0 0.0
    %565 = vmatprep.subr.mxu0 0.0
    %566 = vmatpush1.msra.mxu0 0.0
    %567 = vmatprep.subr.mxu0 0.0
    %568 = vmatpush1.msra.mxu0 0.0
    %569 = vmatprep.subr.mxu0 0.0
    %570 = vmatpush1.msra.mxu0 0.0
    %571 = vmatprep.subr.mxu0 0.0
    %572 = vmatpush1.msra.mxu0 0.0
    %573 = vmatprep.subr.mxu0 0.0
    %574 = vmatpush1.msra.mxu0 0.0
    %575 = vmatprep.subr.mxu0 0.0
    %576 = vmatpush1.msra.mxu0 0.0
    %577 = vmatprep.subr.mxu0 0.0
    %578 = vmatpush1.msra.mxu0 0.0
    %579 = vmatprep.subr.mxu0 0.0
    %580 = vmatpush1.msra.mxu0 0.0
    %581 = vmatprep.subr.mxu0 0.0
    %582 = vmatpush1.msra.mxu0 0.0
    %583 = vmatprep.subr.mxu0 0.0
    %584 = vmatpush1.msra.mxu0 0.0
    %585 = vmatprep.subr.mxu0 0.0
    %586 = vmatpush1.msra.mxu0 0.0
    %587 = vmatprep.subr.mxu0 0.0
    %588 = vmatpush1.msra.mxu0 0.0
    %589 = vmatprep.mubr.f32.mxu0 0.0
    %v590 = vand.u32 %v519, 4294901760
    %v591 = vsub.f32 %v519, %v590
    %v592 = vand.u32 %v591, 4294901760
    %v593 = vsub.f32 %v591, %v592
    %v594 = vand.u32 %v593, 4294901760
    %595 = vmatmul.mubr.f32.gmra.mrb[0].mxu0 %v594
    %v596 = vpop.f32.mrb[0].mxu0
    %v597 = vadd.f32 %v515, %v596
    %v598 = vpop.f32.mrb[0].mxu0
    %599 = vdwg.mxu0
    %600 = vmatprep.subr.mxu0 0.0
    %v601 = vand.u32 %v30, 4294901760
    %v602 = vsub.f32 %v30, %v601
    %v603 = vand.u32 %v602, 4294901760
    %v604 = vsub.f32 %v602, %v603
    %v605 = vand.u32 %v604, 4294901760
    %606 = vmatpush1.msra.mxu0 %v605
    %607 = vmatprep.subr.mxu0 0.0
    %v608 = vand.u32 %v31, 4294901760
    %v609 = vsub.f32 %v31, %v608
    %v610 = vand.u32 %v609, 4294901760
    %v611 = vsub.f32 %v609, %v610
    %v612 = vand.u32 %v611, 4294901760
    %613 = vmatpush1.msra.mxu0 %v612
    %614 = vmatprep.subr.mxu0 0.0
    %v615 = vand.u32 %v32, 4294901760
    %v616 = vsub.f32 %v32, %v615
    %v617 = vand.u32 %v616, 4294901760
    %v618 = vsub.f32 %v616, %v617
    %v619 = vand.u32 %v618, 4294901760
    %620 = vmatpush1.msra.mxu0 %v619
    %621 = vmatprep.subr.mxu0 0.0
    %v622 = vand.u32 %v33, 4294901760
    %v623 = vsub.f32 %v33, %v622
    %v624 = vand.u32 %v623, 4294901760
    %v625 = vsub.f32 %v623, %v624
    %v626 = vand.u32 %v625, 4294901760
    %627 = vmatpush1.msra.mxu0 %v626
    %628 = vmatprep.subr.mxu0 0.0
    %629 = vmatpush1.msra.mxu0 0.0
    %630 = vmatprep.subr.mxu0 0.0
    %631 = vmatpush1.msra.mxu0 0.0
    %632 = vmatprep.subr.mxu0 0.0
    %633 = vmatpush1.msra.mxu0 0.0
    %634 = vmatprep.subr.mxu0 0.0
    %635 = vmatpush1.msra.mxu0 0.0
    %636 = vmatprep.subr.mxu0 0.0
    %637 = vmatpush1.msra.mxu0 0.0
    %638 = vmatprep.subr.mxu0 0.0
    %639 = vmatpush1.msra.mxu0 0.0
    %640 = vmatprep.subr.mxu0 0.0
    %641 = vmatpush1.msra.mxu0 0.0
    %642 = vmatprep.subr.mxu0 0.0
    %643 = vmatpush1.msra.mxu0 0.0
    %644 = vmatprep.subr.mxu0 0.0
    %645 = vmatpush1.msra.mxu0 0.0
    %646 = vmatprep.subr.mxu0 0.0
    %647 = vmatpush1.msra.mxu0 0.0
    %648 = vmatprep.subr.mxu0 0.0
    %649 = vmatpush1.msra.mxu0 0.0
    %650 = vmatprep.subr.mxu0 0.0
    %651 = vmatpush1.msra.mxu0 0.0
    %652 = vmatprep.subr.mxu0 0.0
    %653 = vmatpush1.msra.mxu0 0.0
    %654 = vmatprep.subr.mxu0 0.0
    %655 = vmatpush1.msra.mxu0 0.0
    %656 = vmatprep.subr.mxu0 0.0
    %657 = vmatpush1.msra.mxu0 0.0
    %658 = vmatprep.subr.mxu0 0.0
    %659 = vmatpush1.msra.mxu0 0.0
    %660 = vmatprep.subr.mxu0 0.0
    %661 = vmatpush1.msra.mxu0 0.0
    %662 = vmatprep.subr.mxu0 0.0
    %663 = vmatpush1.msra.mxu0 0.0
    %664 = vmatprep.subr.mxu0 0.0
    %665 = vmatpush1.msra.mxu0 0.0
    %666 = vmatprep.subr.mxu0 0.0
    %667 = vmatpush1.msra.mxu0 0.0
    %668 = vmatprep.subr.mxu0 0.0
    %669 = vmatpush1.msra.mxu0 0.0
    %670 = vmatprep.subr.mxu0 0.0
    %671 = vmatpush1.msra.mxu0 0.0
    %672 = vmatprep.subr.mxu0 0.0
    %673 = vmatpush1.msra.mxu0 0.0
    %674 = vmatprep.subr.mxu0 0.0
    %675 = vmatpush1.msra.mxu0 0.0
    %676 = vmatprep.subr.mxu0 0.0
    %677 = vmatpush1.msra.mxu0 0.0
    %678 = vmatprep.subr.mxu0 0.0
    %679 = vmatpush1.msra.mxu0 0.0
    %680 = vmatprep.subr.mxu0 0.0
    %681 = vmatpush1.msra.mxu0 0.0
    %682 = vmatprep.subr.mxu0 0.0
    %683 = vmatpush1.msra.mxu0 0.0
    %684 = vmatprep.mubr.f32.mxu0 0.0
    %v685 = vand.u32 %v519, 4294901760
    %686 = vmatmul.mubr.f32.gmra.mrb[0].mxu0 %v685
    %v687 = vpop.f32.mrb[0].mxu0
    %v688 = vadd.f32 %v597, %v687
    %v689 = vpop.f32.mrb[0].mxu0
    %690 = vdwg.mxu0
    %691 = vmatprep.subr.mxu0 0.0
    %v692 = vand.u32 %v30, 4294901760
    %v693 = vsub.f32 %v30, %v692
    %694 = vmatpush1.msra.mxu0 %v693
    %695 = vmatprep.subr.mxu0 0.0
    %v696 = vand.u32 %v31, 4294901760
    %v697 = vsub.f32 %v31, %v696
    %698 = vmatpush1.msra.mxu0 %v697
    %699 = vmatprep.subr.mxu0 0.0
    %v700 = vand.u32 %v32, 4294901760
    %v701 = vsub.f32 %v32, %v700
    %702 = vmatpush1.msra.mxu0 %v701
    %703 = vmatprep.subr.mxu0 0.0
    %v704 = vand.u32 %v33, 4294901760
    %v705 = vsub.f32 %v33, %v704
    %706 = vmatpush1.msra.mxu0 %v705
    %707 = vmatprep.subr.mxu0 0.0
    %708 = vmatpush1.msra.mxu0 0.0
    %709 = vmatprep.subr.mxu0 0.0
    %710 = vmatpush1.msra.mxu0 0.0
    %711 = vmatprep.subr.mxu0 0.0
    %712 = vmatpush1.msra.mxu0 0.0
    %713 = vmatprep.subr.mxu0 0.0
    %714 = vmatpush1.msra.mxu0 0.0
    %715 = vmatprep.subr.mxu0 0.0
    %716 = vmatpush1.msra.mxu0 0.0
    %717 = vmatprep.subr.mxu0 0.0
    %718 = vmatpush1.msra.mxu0 0.0
    %719 = vmatprep.subr.mxu0 0.0
    %720 = vmatpush1.msra.mxu0 0.0
    %721 = vmatprep.subr.mxu0 0.0
    %722 = vmatpush1.msra.mxu0 0.0
    %723 = vmatprep.subr.mxu0 0.0
    %724 = vmatpush1.msra.mxu0 0.0
    %725 = vmatprep.subr.mxu0 0.0
    %726 = vmatpush1.msra.mxu0 0.0
    %727 = vmatprep.subr.mxu0 0.0
    %728 = vmatpush1.msra.mxu0 0.0
    %729 = vmatprep.subr.mxu0 0.0
    %730 = vmatpush1.msra.mxu0 0.0
    %731 = vmatprep.subr.mxu0 0.0
    %732 = vmatpush1.msra.mxu0 0.0
    %733 = vmatprep.subr.mxu0 0.0
    %734 = vmatpush1.msra.mxu0 0.0
    %735 = vmatprep.subr.mxu0 0.0
    %736 = vmatpush1.msra.mxu0 0.0
    %737 = vmatprep.subr.mxu0 0.0
    %738 = vmatpush1.msra.mxu0 0.0
    %739 = vmatprep.subr.mxu0 0.0
    %740 = vmatpush1.msra.mxu0 0.0
    %741 = vmatprep.subr.mxu0 0.0
    %742 = vmatpush1.msra.mxu0 0.0
    %743 = vmatprep.subr.mxu0 0.0
    %744 = vmatpush1.msra.mxu0 0.0
    %745 = vmatprep.subr.mxu0 0.0
    %746 = vmatpush1.msra.mxu0 0.0
    %747 = vmatprep.subr.mxu0 0.0
    %748 = vmatpush1.msra.mxu0 0.0
    %749 = vmatprep.subr.mxu0 0.0
    %750 = vmatpush1.msra.mxu0 0.0
    %751 = vmatprep.subr.mxu0 0.0
    %752 = vmatpush1.msra.mxu0 0.0
    %753 = vmatprep.subr.mxu0 0.0
    %754 = vmatpush1.msra.mxu0 0.0
    %755 = vmatprep.subr.mxu0 0.0
    %756 = vmatpush1.msra.mxu0 0.0
    %757 = vmatprep.subr.mxu0 0.0
    %758 = vmatpush1.msra.mxu0 0.0
    %759 = vmatprep.subr.mxu0 0.0
    %760 = vmatpush1.msra.mxu0 0.0
    %761 = vmatprep.subr.mxu0 0.0
    %762 = vmatpush1.msra.mxu0 0.0
    %763 = vmatprep.mubr.f32.mxu0 0.0
    %v764 = vand.u32 %v519, 4294901760
    %v765 = vsub.f32 %v519, %v764
    %766 = vmatmul.mubr.f32.gmra.mrb[0].mxu0 %v765
    %v767 = vpop.f32.mrb[0].mxu0
    %v768 = vadd.f32 %v688, %v767
    %v769 = vpop.f32.mrb[0].mxu0
    %770 = vdwg.mxu0
    %771 = vmatprep.subr.mxu0 0.0
    %v772 = vand.u32 %v30, 4294901760
    %773 = vmatpush1.msra.mxu0 %v772
    %774 = vmatprep.subr.mxu0 0.0
    %v775 = vand.u32 %v31, 4294901760
    %776 = vmatpush1.msra.mxu0 %v775
    %777 = vmatprep.subr.mxu0 0.0
    %v778 = vand.u32 %v32, 4294901760
    %779 = vmatpush1.msra.mxu0 %v778
    %780 = vmatprep.subr.mxu0 0.0
    %v781 = vand.u32 %v33, 4294901760
    %782 = vmatpush1.msra.mxu0 %v781
    %783 = vmatprep.subr.mxu0 0.0
    %784 = vmatpush1.msra.mxu0 0.0
    %785 = vmatprep.subr.mxu0 0.0
    %786 = vmatpush1.msra.mxu0 0.0
    %787 = vmatprep.subr.mxu0 0.0
    %788 = vmatpush1.msra.mxu0 0.0
    %789 = vmatprep.subr.mxu0 0.0
    %790 = vmatpush1.msra.mxu0 0.0
    %791 = vmatprep.subr.mxu0 0.0
    %792 = vmatpush1.msra.mxu0 0.0
    %793 = vmatprep.subr.mxu0 0.0
    %794 = vmatpush1.msra.mxu0 0.0
    %795 = vmatprep.subr.mxu0 0.0
    %796 = vmatpush1.msra.mxu0 0.0
    %797 = vmatprep.subr.mxu0 0.0
    %798 = vmatpush1.msra.mxu0 0.0
    %799 = vmatprep.subr.mxu0 0.0
    %800 = vmatpush1.msra.mxu0 0.0
    %801 = vmatprep.subr.mxu0 0.0
    %802 = vmatpush1.msra.mxu0 0.0
    %803 = vmatprep.subr.mxu0 0.0
    %804 = vmatpush1.msra.mxu0 0.0
    %805 = vmatprep.subr.mxu0 0.0
    %806 = vmatpush1.msra.mxu0 0.0
    %807 = vmatprep.subr.mxu0 0.0
    %808 = vmatpush1.msra.mxu0 0.0
    %809 = vmatprep.subr.mxu0 0.0
    %810 = vmatpush1.msra.mxu0 0.0
    %811 = vmatprep.subr.mxu0 0.0
    %812 = vmatpush1.msra.mxu0 0.0
    %813 = vmatprep.subr.mxu0 0.0
    %814 = vmatpush1.msra.mxu0 0.0
    %815 = vmatprep.subr.mxu0 0.0
    %816 = vmatpush1.msra.mxu0 0.0
    %817 = vmatprep.subr.mxu0 0.0
    %818 = vmatpush1.msra.mxu0 0.0
    %819 = vmatprep.subr.mxu0 0.0
    %820 = vmatpush1.msra.mxu0 0.0
    %821 = vmatprep.subr.mxu0 0.0
    %822 = vmatpush1.msra.mxu0 0.0
    %823 = vmatprep.subr.mxu0 0.0
    %824 = vmatpush1.msra.mxu0 0.0
    %825 = vmatprep.subr.mxu0 0.0
    %826 = vmatpush1.msra.mxu0 0.0
    %827 = vmatprep.subr.mxu0 0.0
    %828 = vmatpush1.msra.mxu0 0.0
    %829 = vmatprep.subr.mxu0 0.0
    %830 = vmatpush1.msra.mxu0 0.0
    %831 = vmatprep.subr.mxu0 0.0
    %832 = vmatpush1.msra.mxu0 0.0
    %833 = vmatprep.subr.mxu0 0.0
    %834 = vmatpush1.msra.mxu0 0.0
    %835 = vmatprep.subr.mxu0 0.0
    %836 = vmatpush1.msra.mxu0 0.0
    %837 = vmatprep.subr.mxu0 0.0
    %838 = vmatpush1.msra.mxu0 0.0
    %839 = vmatprep.mubr.f32.mxu0 0.0
    %v840 = vand.u32 %v519, 4294901760
    %v841 = vsub.f32 %v519, %v840
    %v842 = vand.u32 %v841, 4294901760
    %843 = vmatmul.mubr.f32.gmra.mrb[0].mxu0 %v842
    %v844 = vpop.f32.mrb[0].mxu0
    %v845 = vadd.f32 %v768, %v844
    %v846 = vpop.f32.mrb[0].mxu0
    %847 = vdwg.mxu0
    %848 = vmatprep.subr.mxu0 0.0
    %v849 = vand.u32 %v30, 4294901760
    %v850 = vsub.f32 %v30, %v849
    %v851 = vand.u32 %v850, 4294901760
    %852 = vmatpush1.msra.mxu0 %v851
    %853 = vmatprep.subr.mxu0 0.0
    %v854 = vand.u32 %v31, 4294901760
    %v855 = vsub.f32 %v31, %v854
    %v856 = vand.u32 %v855, 4294901760
    %857 = vmatpush1.msra.mxu0 %v856
    %858 = vmatprep.subr.mxu0 0.0
    %v859 = vand.u32 %v32, 4294901760
    %v860 = vsub.f32 %v32, %v859
    %v861 = vand.u32 %v860, 4294901760
    %862 = vmatpush1.msra.mxu0 %v861
    %863 = vmatprep.subr.mxu0 0.0
    %v864 = vand.u32 %v33, 4294901760
    %v865 = vsub.f32 %v33, %v864
    %v866 = vand.u32 %v865, 4294901760
    %867 = vmatpush1.msra.mxu0 %v866
    %868 = vmatprep.subr.mxu0 0.0
    %869 = vmatpush1.msra.mxu0 0.0
    %870 = vmatprep.subr.mxu0 0.0
    %871 = vmatpush1.msra.mxu0 0.0
    %872 = vmatprep.subr.mxu0 0.0
    %873 = vmatpush1.msra.mxu0 0.0
    %874 = vmatprep.subr.mxu0 0.0
    %875 = vmatpush1.msra.mxu0 0.0
    %876 = vmatprep.subr.mxu0 0.0
    %877 = vmatpush1.msra.mxu0 0.0
    %878 = vmatprep.subr.mxu0 0.0
    %879 = vmatpush1.msra.mxu0 0.0
    %880 = vmatprep.subr.mxu0 0.0
    %881 = vmatpush1.msra.mxu0 0.0
    %882 = vmatprep.subr.mxu0 0.0
    %883 = vmatpush1.msra.mxu0 0.0
    %884 = vmatprep.subr.mxu0 0.0
    %885 = vmatpush1.msra.mxu0 0.0
    %886 = vmatprep.subr.mxu0 0.0
    %887 = vmatpush1.msra.mxu0 0.0
    %888 = vmatprep.subr.mxu0 0.0
    %889 = vmatpush1.msra.mxu0 0.0
    %890 = vmatprep.subr.mxu0 0.0
    %891 = vmatpush1.msra.mxu0 0.0
    %892 = vmatprep.subr.mxu0 0.0
    %893 = vmatpush1.msra.mxu0 0.0
    %894 = vmatprep.subr.mxu0 0.0
    %895 = vmatpush1.msra.mxu0 0.0
    %896 = vmatprep.subr.mxu0 0.0
    %897 = vmatpush1.msra.mxu0 0.0
    %898 = vmatprep.subr.mxu0 0.0
    %899 = vmatpush1.msra.mxu0 0.0
    %900 = vmatprep.subr.mxu0 0.0
    %901 = vmatpush1.msra.mxu0 0.0
    %902 = vmatprep.subr.mxu0 0.0
    %903 = vmatpush1.msra.mxu0 0.0
    %904 = vmatprep.subr.mxu0 0.0
    %905 = vmatpush1.msra.mxu0 0.0
    %906 = vmatprep.subr.mxu0 0.0
    %907 = vmatpush1.msra.mxu0 0.0
    %908 = vmatprep.subr.mxu0 0.0
    %909 = vmatpush1.msra.mxu0 0.0
    %910 = vmatprep.subr.mxu0 0.0
    %911 = vmatpush1.msra.mxu0 0.0
    %912 = vmatprep.subr.mxu0 0.0
    %913 = vmatpush1.msra.mxu0 0.0
    %914 = vmatprep.subr.mxu0 0.0
    %915 = vmatpush1.msra.mxu0 0.0
    %916 = vmatprep.subr.mxu0 0.0
    %917 = vmatpush1.msra.mxu0 0.0
    %918 = vmatprep.subr.mxu0 0.0
    %919 = vmatpush1.msra.mxu0 0.0
    %920 = vmatprep.subr.mxu0 0.0
    %921 = vmatpush1.msra.mxu0 0.0
    %922 = vmatprep.subr.mxu0 0.0
    %923 = vmatpush1.msra.mxu0 0.0
    %924 = vmatprep.mubr.f32.mxu0 0.0
    %v925 = vand.u32 %v519, 4294901760
    %926 = vmatmul.mubr.f32.gmra.mrb[0].mxu0 %v925
    %v927 = vpop.f32.mrb[0].mxu0
    %v928 = vadd.f32 %v845, %v927
    %v929 = vpop.f32.mrb[0].mxu0
    %930 = vdwg.mxu0
    %931 = vmatprep.subr.mxu0 0.0
    %v932 = vand.u32 %v30, 4294901760
    %933 = vmatpush1.msra.mxu0 %v932
    %934 = vmatprep.subr.mxu0 0.0
    %v935 = vand.u32 %v31, 4294901760
    %936 = vmatpush1.msra.mxu0 %v935
    %937 = vmatprep.subr.mxu0 0.0
    %v938 = vand.u32 %v32, 4294901760
    %939 = vmatpush1.msra.mxu0 %v938
    %940 = vmatprep.subr.mxu0 0.0
    %v941 = vand.u32 %v33, 4294901760
    %942 = vmatpush1.msra.mxu0 %v941
    %943 = vmatprep.subr.mxu0 0.0
    %944 = vmatpush1.msra.mxu0 0.0
    %945 = vmatprep.subr.mxu0 0.0
    %946 = vmatpush1.msra.mxu0 0.0
    %947 = vmatprep.subr.mxu0 0.0
    %948 = vmatpush1.msra.mxu0 0.0
    %949 = vmatprep.subr.mxu0 0.0
    %950 = vmatpush1.msra.mxu0 0.0
    %951 = vmatprep.subr.mxu0 0.0
    %952 = vmatpush1.msra.mxu0 0.0
    %953 = vmatprep.subr.mxu0 0.0
    %954 = vmatpush1.msra.mxu0 0.0
    %955 = vmatprep.subr.mxu0 0.0
    %956 = vmatpush1.msra.mxu0 0.0
    %957 = vmatprep.subr.mxu0 0.0
    %958 = vmatpush1.msra.mxu0 0.0
    %959 = vmatprep.subr.mxu0 0.0
    %960 = vmatpush1.msra.mxu0 0.0
    %961 = vmatprep.subr.mxu0 0.0
    %962 = vmatpush1.msra.mxu0 0.0
    %963 = vmatprep.subr.mxu0 0.0
    %964 = vmatpush1.msra.mxu0 0.0
    %965 = vmatprep.subr.mxu0 0.0
    %966 = vmatpush1.msra.mxu0 0.0
    %967 = vmatprep.subr.mxu0 0.0
    %968 = vmatpush1.msra.mxu0 0.0
    %969 = vmatprep.subr.mxu0 0.0
    %970 = vmatpush1.msra.mxu0 0.0
    %971 = vmatprep.subr.mxu0 0.0
    %972 = vmatpush1.msra.mxu0 0.0
    %973 = vmatprep.subr.mxu0 0.0
    %974 = vmatpush1.msra.mxu0 0.0
    %975 = vmatprep.subr.mxu0 0.0
    %976 = vmatpush1.msra.mxu0 0.0
    %977 = vmatprep.subr.mxu0 0.0
    %978 = vmatpush1.msra.mxu0 0.0
    %979 = vmatprep.subr.mxu0 0.0
    %980 = vmatpush1.msra.mxu0 0.0
    %981 = vmatprep.subr.mxu0 0.0
    %982 = vmatpush1.msra.mxu0 0.0
    %983 = vmatprep.subr.mxu0 0.0
    %984 = vmatpush1.msra.mxu0 0.0
    %985 = vmatprep.subr.mxu0 0.0
    %986 = vmatpush1.msra.mxu0 0.0
    %987 = vmatprep.subr.mxu0 0.0
    %988 = vmatpush1.msra.mxu0 0.0
    %989 = vmatprep.subr.mxu0 0.0
    %990 = vmatpush1.msra.mxu0 0.0
    %991 = vmatprep.subr.mxu0 0.0
    %992 = vmatpush1.msra.mxu0 0.0
    %993 = vmatprep.subr.mxu0 0.0
    %994 = vmatpush1.msra.mxu0 0.0
    %995 = vmatprep.subr.mxu0 0.0
    %996 = vmatpush1.msra.mxu0 0.0
    %997 = vmatprep.subr.mxu0 0.0
    %998 = vmatpush1.msra.mxu0 0.0
    %999 = vmatprep.mubr.f32.mxu0 0.0
    %v1000 = vand.u32 %v519, 4294901760
    %1001 = vmatmul.mubr.f32.gmra.mrb[0].mxu0 %v1000
    %v1002 = vpop.f32.mrb[0].mxu0
    %v1003 = vadd.f32 %v928, %v1002
    %v1004 = vpop.f32.mrb[0].mxu0
    %1005 = vdwg.mxu0
    %v1006 = vmax.f32 %v1003, 0.0
    %v1008 = vlaneseq
    %v1009 = vshrl.u32 %v1008, 7
    %v1010 = vsub.s32 0, %v1009
    %v1011 = vrot.slane %v39, %v1010
    %v1014 = vsel %vm517, %v1006, 0
    %1016 = vmatprep.subr.mxu0 0.0
    %v1017 = vand.u32 %v35, 4294901760
    %1018 = vmatpush1.msra.mxu0 %v1017
    %1019 = vmatprep.subr.mxu0 0.0
    %v1020 = vand.u32 %v36, 4294901760
    %1021 = vmatpush1.msra.mxu0 %v1020
    %1022 = vmatprep.subr.mxu0 0.0
    %v1023 = vand.u32 %v37, 4294901760
    %1024 = vmatpush1.msra.mxu0 %v1023
    %1025 = vmatprep.subr.mxu0 0.0
    %v1026 = vand.u32 %v38, 4294901760
    %1027 = vmatpush1.msra.mxu0 %v1026
    %1028 = vmatprep.subr.mxu0 0.0
    %1029 = vmatpush1.msra.mxu0 0.0
    %1030 = vmatprep.subr.mxu0 0.0
    %1031 = vmatpush1.msra.mxu0 0.0
    %1032 = vmatprep.subr.mxu0 0.0
    %1033 = vmatpush1.msra.mxu0 0.0
    %1034 = vmatprep.subr.mxu0 0.0
    %1035 = vmatpush1.msra.mxu0 0.0
    %1036 = vmatprep.subr.mxu0 0.0
    %1037 = vmatpush1.msra.mxu0 0.0
    %1038 = vmatprep.subr.mxu0 0.0
    %1039 = vmatpush1.msra.mxu0 0.0
    %1040 = vmatprep.subr.mxu0 0.0
    %1041 = vmatpush1.msra.mxu0 0.0
    %1042 = vmatprep.subr.mxu0 0.0
    %1043 = vmatpush1.msra.mxu0 0.0
    %1044 = vmatprep.subr.mxu0 0.0
    %1045 = vmatpush1.msra.mxu0 0.0
    %1046 = vmatprep.subr.mxu0 0.0
    %1047 = vmatpush1.msra.mxu0 0.0
    %1048 = vmatprep.subr.mxu0 0.0
    %1049 = vmatpush1.msra.mxu0 0.0
    %1050 = vmatprep.subr.mxu0 0.0
    %1051 = vmatpush1.msra.mxu0 0.0
    %1052 = vmatprep.subr.mxu0 0.0
    %1053 = vmatpush1.msra.mxu0 0.0
    %1054 = vmatprep.subr.mxu0 0.0
    %1055 = vmatpush1.msra.mxu0 0.0
    %1056 = vmatprep.subr.mxu0 0.0
    %1057 = vmatpush1.msra.mxu0 0.0
    %1058 = vmatprep.subr.mxu0 0.0
    %1059 = vmatpush1.msra.mxu0 0.0
    %1060 = vmatprep.subr.mxu0 0.0
    %1061 = vmatpush1.msra.mxu0 0.0
    %1062 = vmatprep.subr.mxu0 0.0
    %1063 = vmatpush1.msra.mxu0 0.0
    %1064 = vmatprep.subr.mxu0 0.0
    %1065 = vmatpush1.msra.mxu0 0.0
    %1066 = vmatprep.subr.mxu0 0.0
    %1067 = vmatpush1.msra.mxu0 0.0
    %1068 = vmatprep.subr.mxu0 0.0
    %1069 = vmatpush1.msra.mxu0 0.0
    %1070 = vmatprep.subr.mxu0 0.0
    %1071 = vmatpush1.msra.mxu0 0.0
    %1072 = vmatprep.subr.mxu0 0.0
    %1073 = vmatpush1.msra.mxu0 0.0
    %1074 = vmatprep.subr.mxu0 0.0
    %1075 = vmatpush1.msra.mxu0 0.0
    %1076 = vmatprep.subr.mxu0 0.0
    %1077 = vmatpush1.msra.mxu0 0.0
    %1078 = vmatprep.subr.mxu0 0.0
    %1079 = vmatpush1.msra.mxu0 0.0
    %1080 = vmatprep.subr.mxu0 0.0
    %1081 = vmatpush1.msra.mxu0 0.0
    %1082 = vmatprep.subr.mxu0 0.0
    %1083 = vmatpush1.msra.mxu0 0.0
    %1084 = vmatprep.mubr.f32.mxu0 0.0
    %v1085 = vand.u32 %v1014, 4294901760
    %v1086 = vsub.f32 %v1014, %v1085
    %v1087 = vand.u32 %v1086, 4294901760
    %v1088 = vsub.f32 %v1086, %v1087
    %v1089 = vand.u32 %v1088, 4294901760
    %1090 = vmatmul.mubr.f32.gmra.mrb[0].mxu0 %v1089
    %v1091 = vpop.f32.mrb[0].mxu0
    %v1092 = vadd.f32 %v1011, %v1091
    %v1093 = vpop.f32.mrb[0].mxu0
    %1094 = vdwg.mxu0
    %1095 = vmatprep.subr.mxu0 0.0
    %v1096 = vand.u32 %v35, 4294901760
    %v1097 = vsub.f32 %v35, %v1096
    %v1098 = vand.u32 %v1097, 4294901760
    %v1099 = vsub.f32 %v1097, %v1098
    %v1100 = vand.u32 %v1099, 4294901760
    %1101 = vmatpush1.msra.mxu0 %v1100
    %1102 = vmatprep.subr.mxu0 0.0
    %v1103 = vand.u32 %v36, 4294901760
    %v1104 = vsub.f32 %v36, %v1103
    %v1105 = vand.u32 %v1104, 4294901760
    %v1106 = vsub.f32 %v1104, %v1105
    %v1107 = vand.u32 %v1106, 4294901760
    %1108 = vmatpush1.msra.mxu0 %v1107
    %1109 = vmatprep.subr.mxu0 0.0
    %v1110 = vand.u32 %v37, 4294901760
    %v1111 = vsub.f32 %v37, %v1110
    %v1112 = vand.u32 %v1111, 4294901760
    %v1113 = vsub.f32 %v1111, %v1112
    %v1114 = vand.u32 %v1113, 4294901760
    %1115 = vmatpush1.msra.mxu0 %v1114
    %1116 = vmatprep.subr.mxu0 0.0
    %v1117 = vand.u32 %v38, 4294901760
    %v1118 = vsub.f32 %v38, %v1117
    %v1119 = vand.u32 %v1118, 4294901760
    %v1120 = vsub.f32 %v1118, %v1119
    %v1121 = vand.u32 %v1120, 4294901760
    %1122 = vmatpush1.msra.mxu0 %v1121
    %1123 = vmatprep.subr.mxu0 0.0
    %1124 = vmatpush1.msra.mxu0 0.0
    %1125 = vmatprep.subr.mxu0 0.0
    %1126 = vmatpush1.msra.mxu0 0.0
    %1127 = vmatprep.subr.mxu0 0.0
    %1128 = vmatpush1.msra.mxu0 0.0
    %1129 = vmatprep.subr.mxu0 0.0
    %1130 = vmatpush1.msra.mxu0 0.0
    %1131 = vmatprep.subr.mxu0 0.0
    %1132 = vmatpush1.msra.mxu0 0.0
    %1133 = vmatprep.subr.mxu0 0.0
    %1134 = vmatpush1.msra.mxu0 0.0
    %1135 = vmatprep.subr.mxu0 0.0
    %1136 = vmatpush1.msra.mxu0 0.0
    %1137 = vmatprep.subr.mxu0 0.0
    %1138 = vmatpush1.msra.mxu0 0.0
    %1139 = vmatprep.subr.mxu0 0.0
    %1140 = vmatpush1.msra.mxu0 0.0
    %1141 = vmatprep.subr.mxu0 0.0
    %1142 = vmatpush1.msra.mxu0 0.0
    %1143 = vmatprep.subr.mxu0 0.0
    %1144 = vmatpush1.msra.mxu0 0.0
    %1145 = vmatprep.subr.mxu0 0.0
    %1146 = vmatpush1.msra.mxu0 0.0
    %1147 = vmatprep.subr.mxu0 0.0
    %1148 = vmatpush1.msra.mxu0 0.0
    %1149 = vmatprep.subr.mxu0 0.0
    %1150 = vmatpush1.msra.mxu0 0.0
    %1151 = vmatprep.subr.mxu0 0.0
    %1152 = vmatpush1.msra.mxu0 0.0
    %1153 = vmatprep.subr.mxu0 0.0
    %1154 = vmatpush1.msra.mxu0 0.0
    %1155 = vmatprep.subr.mxu0 0.0
    %1156 = vmatpush1.msra.mxu0 0.0
    %1157 = vmatprep.subr.mxu0 0.0
    %1158 = vmatpush1.msra.mxu0 0.0
    %1159 = vmatprep.subr.mxu0 0.0
    %1160 = vmatpush1.msra.mxu0 0.0
    %1161 = vmatprep.subr.mxu0 0.0
    %1162 = vmatpush1.msra.mxu0 0.0
    %1163 = vmatprep.subr.mxu0 0.0
    %1164 = vmatpush1.msra.mxu0 0.0
    %1165 = vmatprep.subr.mxu0 0.0
    %1166 = vmatpush1.msra.mxu0 0.0
    %1167 = vmatprep.subr.mxu0 0.0
    %1168 = vmatpush1.msra.mxu0 0.0
    %1169 = vmatprep.subr.mxu0 0.0
    %1170 = vmatpush1.msra.mxu0 0.0
    %1171 = vmatprep.subr.mxu0 0.0
    %1172 = vmatpush1.msra.mxu0 0.0
    %1173 = vmatprep.subr.mxu0 0.0
    %1174 = vmatpush1.msra.mxu0 0.0
    %1175 = vmatprep.subr.mxu0 0.0
    %1176 = vmatpush1.msra.mxu0 0.0
    %1177 = vmatprep.subr.mxu0 0.0
    %1178 = vmatpush1.msra.mxu0 0.0
    %1179 = vmatprep.mubr.f32.mxu0 0.0
    %v1180 = vand.u32 %v1014, 4294901760
    %1181 = vmatmul.mubr.f32.gmra.mrb[0].mxu0 %v1180
    %v1182 = vpop.f32.mrb[0].mxu0
    %v1183 = vadd.f32 %v1092, %v1182
    %v1184 = vpop.f32.mrb[0].mxu0
    %1185 = vdwg.mxu0
    %1186 = vmatprep.subr.mxu0 0.0
    %v1187 = vand.u32 %v35, 4294901760
    %v1188 = vsub.f32 %v35, %v1187
    %1189 = vmatpush1.msra.mxu0 %v1188
    %1190 = vmatprep.subr.mxu0 0.0
    %v1191 = vand.u32 %v36, 4294901760
    %v1192 = vsub.f32 %v36, %v1191
    %1193 = vmatpush1.msra.mxu0 %v1192
    %1194 = vmatprep.subr.mxu0 0.0
    %v1195 = vand.u32 %v37, 4294901760
    %v1196 = vsub.f32 %v37, %v1195
    %1197 = vmatpush1.msra.mxu0 %v1196
    %1198 = vmatprep.subr.mxu0 0.0
    %v1199 = vand.u32 %v38, 4294901760
    %v1200 = vsub.f32 %v38, %v1199
    %1201 = vmatpush1.msra.mxu0 %v1200
    %1202 = vmatprep.subr.mxu0 0.0
    %1203 = vmatpush1.msra.mxu0 0.0
    %1204 = vmatprep.subr.mxu0 0.0
    %1205 = vmatpush1.msra.mxu0 0.0
    %1206 = vmatprep.subr.mxu0 0.0
    %1207 = vmatpush1.msra.mxu0 0.0
    %1208 = vmatprep.subr.mxu0 0.0
    %1209 = vmatpush1.msra.mxu0 0.0
    %1210 = vmatprep.subr.mxu0 0.0
    %1211 = vmatpush1.msra.mxu0 0.0
    %1212 = vmatprep.subr.mxu0 0.0
    %1213 = vmatpush1.msra.mxu0 0.0
    %1214 = vmatprep.subr.mxu0 0.0
    %1215 = vmatpush1.msra.mxu0 0.0
    %1216 = vmatprep.subr.mxu0 0.0
    %1217 = vmatpush1.msra.mxu0 0.0
    %1218 = vmatprep.subr.mxu0 0.0
    %1219 = vmatpush1.msra.mxu0 0.0
    %1220 = vmatprep.subr.mxu0 0.0
    %1221 = vmatpush1.msra.mxu0 0.0
    %1222 = vmatprep.subr.mxu0 0.0
    %1223 = vmatpush1.msra.mxu0 0.0
    %1224 = vmatprep.subr.mxu0 0.0
    %1225 = vmatpush1.msra.mxu0 0.0
    %1226 = vmatprep.subr.mxu0 0.0
    %1227 = vmatpush1.msra.mxu0 0.0
    %1228 = vmatprep.subr.mxu0 0.0
    %1229 = vmatpush1.msra.mxu0 0.0
    %1230 = vmatprep.subr.mxu0 0.0
    %1231 = vmatpush1.msra.mxu0 0.0
    %1232 = vmatprep.subr.mxu0 0.0
    %1233 = vmatpush1.msra.mxu0 0.0
    %1234 = vmatprep.subr.mxu0 0.0
    %1235 = vmatpush1.msra.mxu0 0.0
    %1236 = vmatprep.subr.mxu0 0.0
    %1237 = vmatpush1.msra.mxu0 0.0
    %1238 = vmatprep.subr.mxu0 0.0
    %1239 = vmatpush1.msra.mxu0 0.0
    %1240 = vmatprep.subr.mxu0 0.0
    %1241 = vmatpush1.msra.mxu0 0.0
    %1242 = vmatprep.subr.mxu0 0.0
    %1243 = vmatpush1.msra.mxu0 0.0
    %1244 = vmatprep.subr.mxu0 0.0
    %1245 = vmatpush1.msra.mxu0 0.0
    %1246 = vmatprep.subr.mxu0 0.0
    %1247 = vmatpush1.msra.mxu0 0.0
    %1248 = vmatprep.subr.mxu0 0.0
    %1249 = vmatpush1.msra.mxu0 0.0
    %1250 = vmatprep.subr.mxu0 0.0
    %1251 = vmatpush1.msra.mxu0 0.0
    %1252 = vmatprep.subr.mxu0 0.0
    %1253 = vmatpush1.msra.mxu0 0.0
    %1254 = vmatprep.subr.mxu0 0.0
    %1255 = vmatpush1.msra.mxu0 0.0
    %1256 = vmatprep.subr.mxu0 0.0
    %1257 = vmatpush1.msra.mxu0 0.0
    %1258 = vmatprep.mubr.f32.mxu0 0.0
    %v1259 = vand.u32 %v1014, 4294901760
    %v1260 = vsub.f32 %v1014, %v1259
    %1261 = vmatmul.mubr.f32.gmra.mrb[0].mxu0 %v1260
    %v1262 = vpop.f32.mrb[0].mxu0
    %v1263 = vadd.f32 %v1183, %v1262
    %v1264 = vpop.f32.mrb[0].mxu0
    %1265 = vdwg.mxu0
    %1266 = vmatprep.subr.mxu0 0.0
    %v1267 = vand.u32 %v35, 4294901760
    %1268 = vmatpush1.msra.mxu0 %v1267
    %1269 = vmatprep.subr.mxu0 0.0
    %v1270 = vand.u32 %v36, 4294901760
    %1271 = vmatpush1.msra.mxu0 %v1270
    %1272 = vmatprep.subr.mxu0 0.0
    %v1273 = vand.u32 %v37, 4294901760
    %1274 = vmatpush1.msra.mxu0 %v1273
    %1275 = vmatprep.subr.mxu0 0.0
    %v1276 = vand.u32 %v38, 4294901760
    %1277 = vmatpush1.msra.mxu0 %v1276
    %1278 = vmatprep.subr.mxu0 0.0
    %1279 = vmatpush1.msra.mxu0 0.0
    %1280 = vmatprep.subr.mxu0 0.0
    %1281 = vmatpush1.msra.mxu0 0.0
    %1282 = vmatprep.subr.mxu0 0.0
    %1283 = vmatpush1.msra.mxu0 0.0
    %1284 = vmatprep.subr.mxu0 0.0
    %1285 = vmatpush1.msra.mxu0 0.0
    %1286 = vmatprep.subr.mxu0 0.0
    %1287 = vmatpush1.msra.mxu0 0.0
    %1288 = vmatprep.subr.mxu0 0.0
    %1289 = vmatpush1.msra.mxu0 0.0
    %1290 = vmatprep.subr.mxu0 0.0
    %1291 = vmatpush1.msra.mxu0 0.0
    %1292 = vmatprep.subr.mxu0 0.0
    %1293 = vmatpush1.msra.mxu0 0.0
    %1294 = vmatprep.subr.mxu0 0.0
    %1295 = vmatpush1.msra.mxu0 0.0
    %1296 = vmatprep.subr.mxu0 0.0
    %1297 = vmatpush1.msra.mxu0 0.0
    %1298 = vmatprep.subr.mxu0 0.0
    %1299 = vmatpush1.msra.mxu0 0.0
    %1300 = vmatprep.subr.mxu0 0.0
    %1301 = vmatpush1.msra.mxu0 0.0
    %1302 = vmatprep.subr.mxu0 0.0
    %1303 = vmatpush1.msra.mxu0 0.0
    %1304 = vmatprep.subr.mxu0 0.0
    %1305 = vmatpush1.msra.mxu0 0.0
    %1306 = vmatprep.subr.mxu0 0.0
    %1307 = vmatpush1.msra.mxu0 0.0
    %1308 = vmatprep.subr.mxu0 0.0
    %1309 = vmatpush1.msra.mxu0 0.0
    %1310 = vmatprep.subr.mxu0 0.0
    %1311 = vmatpush1.msra.mxu0 0.0
    %1312 = vmatprep.subr.mxu0 0.0
    %1313 = vmatpush1.msra.mxu0 0.0
    %1314 = vmatprep.subr.mxu0 0.0
    %1315 = vmatpush1.msra.mxu0 0.0
    %1316 = vmatprep.subr.mxu0 0.0
    %1317 = vmatpush1.msra.mxu0 0.0
    %1318 = vmatprep.subr.mxu0 0.0
    %1319 = vmatpush1.msra.mxu0 0.0
    %1320 = vmatprep.subr.mxu0 0.0
    %1321 = vmatpush1.msra.mxu0 0.0
    %1322 = vmatprep.subr.mxu0 0.0
    %1323 = vmatpush1.msra.mxu0 0.0
    %1324 = vmatprep.subr.mxu0 0.0
    %1325 = vmatpush1.msra.mxu0 0.0
    %1326 = vmatprep.subr.mxu0 0.0
    %1327 = vmatpush1.msra.mxu0 0.0
    %1328 = vmatprep.subr.mxu0 0.0
    %1329 = vmatpush1.msra.mxu0 0.0
    %1330 = vmatprep.subr.mxu0 0.0
    %1331 = vmatpush1.msra.mxu0 0.0
    %1332 = vmatprep.subr.mxu0 0.0
    %1333 = vmatpush1.msra.mxu0 0.0
    %1334 = vmatprep.mubr.f32.mxu0 0.0
    %v1335 = vand.u32 %v1014, 4294901760
    %v1336 = vsub.f32 %v1014, %v1335
    %v1337 = vand.u32 %v1336, 4294901760
    %1338 = vmatmul.mubr.f32.gmra.mrb[0].mxu0 %v1337
    %v1339 = vpop.f32.mrb[0].mxu0
    %v1340 = vadd.f32 %v1263, %v1339
    %v1341 = vpop.f32.mrb[0].mxu0
    %1342 = vdwg.mxu0
    %1343 = vmatprep.subr.mxu0 0.0
    %v1344 = vand.u32 %v35, 4294901760
    %v1345 = vsub.f32 %v35, %v1344
    %v1346 = vand.u32 %v1345, 4294901760
    %1347 = vmatpush1.msra.mxu0 %v1346
    %1348 = vmatprep.subr.mxu0 0.0
    %v1349 = vand.u32 %v36, 4294901760
    %v1350 = vsub.f32 %v36, %v1349
    %v1351 = vand.u32 %v1350, 4294901760
    %1352 = vmatpush1.msra.mxu0 %v1351
    %1353 = vmatprep.subr.mxu0 0.0
    %v1354 = vand.u32 %v37, 4294901760
    %v1355 = vsub.f32 %v37, %v1354
    %v1356 = vand.u32 %v1355, 4294901760
    %1357 = vmatpush1.msra.mxu0 %v1356
    %1358 = vmatprep.subr.mxu0 0.0
    %v1359 = vand.u32 %v38, 4294901760
    %v1360 = vsub.f32 %v38, %v1359
    %v1361 = vand.u32 %v1360, 4294901760
    %1362 = vmatpush1.msra.mxu0 %v1361
    %1363 = vmatprep.subr.mxu0 0.0
    %1364 = vmatpush1.msra.mxu0 0.0
    %1365 = vmatprep.subr.mxu0 0.0
    %1366 = vmatpush1.msra.mxu0 0.0
    %1367 = vmatprep.subr.mxu0 0.0
    %1368 = vmatpush1.msra.mxu0 0.0
    %1369 = vmatprep.subr.mxu0 0.0
    %1370 = vmatpush1.msra.mxu0 0.0
    %1371 = vmatprep.subr.mxu0 0.0
    %1372 = vmatpush1.msra.mxu0 0.0
    %1373 = vmatprep.subr.mxu0 0.0
    %1374 = vmatpush1.msra.mxu0 0.0
    %1375 = vmatprep.subr.mxu0 0.0
    %1376 = vmatpush1.msra.mxu0 0.0
    %1377 = vmatprep.subr.mxu0 0.0
    %1378 = vmatpush1.msra.mxu0 0.0
    %1379 = vmatprep.subr.mxu0 0.0
    %1380 = vmatpush1.msra.mxu0 0.0
    %1381 = vmatprep.subr.mxu0 0.0
    %1382 = vmatpush1.msra.mxu0 0.0
    %1383 = vmatprep.subr.mxu0 0.0
    %1384 = vmatpush1.msra.mxu0 0.0
    %1385 = vmatprep.subr.mxu0 0.0
    %1386 = vmatpush1.msra.mxu0 0.0
    %1387 = vmatprep.subr.mxu0 0.0
    %1388 = vmatpush1.msra.mxu0 0.0
    %1389 = vmatprep.subr.mxu0 0.0
    %1390 = vmatpush1.msra.mxu0 0.0
    %1391 = vmatprep.subr.mxu0 0.0
    %1392 = vmatpush1.msra.mxu0 0.0
    %1393 = vmatprep.subr.mxu0 0.0
    %1394 = vmatpush1.msra.mxu0 0.0
    %1395 = vmatprep.subr.mxu0 0.0
    %1396 = vmatpush1.msra.mxu0 0.0
    %1397 = vmatprep.subr.mxu0 0.0
    %1398 = vmatpush1.msra.mxu0 0.0
    %1399 = vmatprep.subr.mxu0 0.0
    %1400 = vmatpush1.msra.mxu0 0.0
    %1401 = vmatprep.subr.mxu0 0.0
    %1402 = vmatpush1.msra.mxu0 0.0
    %1403 = vmatprep.subr.mxu0 0.0
    %1404 = vmatpush1.msra.mxu0 0.0
    %1405 = vmatprep.subr.mxu0 0.0
    %1406 = vmatpush1.msra.mxu0 0.0
    %1407 = vmatprep.subr.mxu0 0.0
    %1408 = vmatpush1.msra.mxu0 0.0
    %1409 = vmatprep.subr.mxu0 0.0
    %1410 = vmatpush1.msra.mxu0 0.0
    %1411 = vmatprep.subr.mxu0 0.0
    %1412 = vmatpush1.msra.mxu0 0.0
    %1413 = vmatprep.subr.mxu0 0.0
    %1414 = vmatpush1.msra.mxu0 0.0
    %1415 = vmatprep.subr.mxu0 0.0
    %1416 = vmatpush1.msra.mxu0 0.0
    %1417 = vmatprep.subr.mxu0 0.0
    %1418 = vmatpush1.msra.mxu0 0.0
    %1419 = vmatprep.mubr.f32.mxu0 0.0
    %v1420 = vand.u32 %v1014, 4294901760
    %1421 = vmatmul.mubr.f32.gmra.mrb[0].mxu0 %v1420
    %v1422 = vpop.f32.mrb[0].mxu0
    %v1423 = vadd.f32 %v1340, %v1422
    %v1424 = vpop.f32.mrb[0].mxu0
    %1425 = vdwg.mxu0
    %1426 = vmatprep.subr.mxu0 0.0
    %v1427 = vand.u32 %v35, 4294901760
    %1428 = vmatpush1.msra.mxu0 %v1427
    %1429 = vmatprep.subr.mxu0 0.0
    %v1430 = vand.u32 %v36, 4294901760
    %1431 = vmatpush1.msra.mxu0 %v1430
    %1432 = vmatprep.subr.mxu0 0.0
    %v1433 = vand.u32 %v37, 4294901760
    %1434 = vmatpush1.msra.mxu0 %v1433
    %1435 = vmatprep.subr.mxu0 0.0
    %v1436 = vand.u32 %v38, 4294901760
    %1437 = vmatpush1.msra.mxu0 %v1436
    %1438 = vmatprep.subr.mxu0 0.0
    %1439 = vmatpush1.msra.mxu0 0.0
    %1440 = vmatprep.subr.mxu0 0.0
    %1441 = vmatpush1.msra.mxu0 0.0
    %1442 = vmatprep.subr.mxu0 0.0
    %1443 = vmatpush1.msra.mxu0 0.0
    %1444 = vmatprep.subr.mxu0 0.0
    %1445 = vmatpush1.msra.mxu0 0.0
    %1446 = vmatprep.subr.mxu0 0.0
    %1447 = vmatpush1.msra.mxu0 0.0
    %1448 = vmatprep.subr.mxu0 0.0
    %1449 = vmatpush1.msra.mxu0 0.0
    %1450 = vmatprep.subr.mxu0 0.0
    %1451 = vmatpush1.msra.mxu0 0.0
    %1452 = vmatprep.subr.mxu0 0.0
    %1453 = vmatpush1.msra.mxu0 0.0
    %1454 = vmatprep.subr.mxu0 0.0
    %1455 = vmatpush1.msra.mxu0 0.0
    %1456 = vmatprep.subr.mxu0 0.0
    %1457 = vmatpush1.msra.mxu0 0.0
    %1458 = vmatprep.subr.mxu0 0.0
    %1459 = vmatpush1.msra.mxu0 0.0
    %1460 = vmatprep.subr.mxu0 0.0
    %1461 = vmatpush1.msra.mxu0 0.0
    %1462 = vmatprep.subr.mxu0 0.0
    %1463 = vmatpush1.msra.mxu0 0.0
    %1464 = vmatprep.subr.mxu0 0.0
    %1465 = vmatpush1.msra.mxu0 0.0
    %1466 = vmatprep.subr.mxu0 0.0
    %1467 = vmatpush1.msra.mxu0 0.0
    %1468 = vmatprep.subr.mxu0 0.0
    %1469 = vmatpush1.msra.mxu0 0.0
    %1470 = vmatprep.subr.mxu0 0.0
    %1471 = vmatpush1.msra.mxu0 0.0
    %1472 = vmatprep.subr.mxu0 0.0
    %1473 = vmatpush1.msra.mxu0 0.0
    %1474 = vmatprep.subr.mxu0 0.0
    %1475 = vmatpush1.msra.mxu0 0.0
    %1476 = vmatprep.subr.mxu0 0.0
    %1477 = vmatpush1.msra.mxu0 0.0
    %1478 = vmatprep.subr.mxu0 0.0
    %1479 = vmatpush1.msra.mxu0 0.0
    %1480 = vmatprep.subr.mxu0 0.0
    %1481 = vmatpush1.msra.mxu0 0.0
    %1482 = vmatprep.subr.mxu0 0.0
    %1483 = vmatpush1.msra.mxu0 0.0
    %1484 = vmatprep.subr.mxu0 0.0
    %1485 = vmatpush1.msra.mxu0 0.0
    %1486 = vmatprep.subr.mxu0 0.0
    %1487 = vmatpush1.msra.mxu0 0.0
    %1488 = vmatprep.subr.mxu0 0.0
    %1489 = vmatpush1.msra.mxu0 0.0
    %1490 = vmatprep.subr.mxu0 0.0
    %1491 = vmatpush1.msra.mxu0 0.0
    %1492 = vmatprep.subr.mxu0 0.0
    %1493 = vmatpush1.msra.mxu0 0.0
    %1494 = vmatprep.mubr.f32.mxu0 0.0
    %v1495 = vand.u32 %v1014, 4294901760
    %1496 = vmatmul.mubr.f32.gmra.mrb[0].mxu0 %v1495
    %v1497 = vpop.f32.mrb[0].mxu0
    %v1498 = vadd.f32 %v1423, %v1497
    %v1499 = vpop.f32.mrb[0].mxu0
    %1500 = vdwg.mxu0
    %vm1501 = vcmask 64512
    %1502 = vst.msk [vmem:[#allocation2] sm:$0xff] %vm1501, %v1498
    // Predicated region
    $region30: #{cdk_stages_forward.1} parent=1 // pred_check
      _
    $region31: #{cdk_stages_forward.1} parent=1 // pred_check_branch
      %1504 = sbr.rel (0) target = $region33
    $region32: #{cdk_stages_forward.1} parent=1 // pred_region
      %s1506 = ssub.s32 128, 128
      %1507 = vsyncadd [#allocation3], %s1506
      %s1509 = sshll.u32 [#allocation2], 4
      %s1510 = int_to_ptr.vmem [resolvable:$true] %s1509
      %1512 = dma.vmem_to_hbm [thread:$0]  %s1510, 128, %s7, [#allocation3]
    $region33: #{cdk_stages_forward.1} parent=1 // pred_fallthru
      _
    // Predicated region
    $region34: #{cdk_stages_forward.1} parent=1 // pred_check
      _
    $region35: #{cdk_stages_forward.1} parent=1 // pred_check_branch
      %1514 = sbr.rel (0) target = $region37
    $region36: #{cdk_stages_forward.1} parent=1 // pred_region
      %1515 = dma.done [#allocation3], 128
    $region37: #{cdk_stages_forward.1} parent=1 // pred_fallthru
      _
    %1516 = vsyncpa [#allocation3], 1

</llo_original>
